<compile_context>
chip_gen: v6e
topology: v6e:2x2x1
jax: 0.10.0
libtpu: 0.0.40
codegen_flags: <defaults>
</compile_context>

<pallas_src>
import functools

import numpy as np
import jax
import jax.numpy as jnp
from jax import lax
from jax.experimental import pallas as pl
from jax.experimental.pallas import tpu as pltpu


def _dot_t(a, b):
    """a^T @ b, contracting the shared leading (row) axis of a and b."""
    return lax.dot_general(a, b, (((0,), (0,)), ((), ())),
                           preferred_element_type=jnp.float32)


# --------------------------------------------------------------------------- kernel

def fused_diffusion_kernel(
        lin3_ref,                                   # SMEM (3,): [w3a, w3b, b3]
        feat_ref,                                   # [N*B, T]   node features (row = n*B+b)
        xud_ref,                                    # [E*B, 2T]  concat(upstream, downstream)
        idx_ref,                                    # [E*B, 5] int32: srcrow,dstrow,dstnode,e,b
        edata_ref,                                  # [E*B, 2] f32: distance, alpha
        wfcwa_ref,                                  # [T, 2]   fc @ [attn_src | attn_dst]
        w1_ref,                                     # [2T, 2H] block-diag NAM stage 1
        nrm_ref,                                    # [3, 2H]  rows: b1, gamma1, beta1
        w2_ref, b2_ref,                             # [2H, 2], [1, 2] block-diag NAM stage 2
        pred_ref, v_ref,                            # out: [N, B], [E, B] (lane-dense)
        *, time_units, num_timesteps_input):
    f32 = jnp.float32
    NB, T = feat_ref.shape
    EB = xud_ref.shape[0]
    H2 = w1_ref.shape[1]
    H = H2 // 2
    N, B = pred_ref.shape
    E = v_ref.shape[0]
    TT = int(num_timesteps_input)
    ttf = float(TT)

    # ---------------- graph index columns & one-hot operators (built in VMEM) -------
    idx = idx_ref[...]
    srow = idx[:, 0:1]
    drow = idx[:, 1:2]
    dnode = idx[:, 2:3]
    eidx = idx[:, 3:4]
    bidx = idx[:, 4:5]
    lane_nb = lax.broadcasted_iota(jnp.int32, (EB, NB), 1)
    src_match = lane_nb == srow                                                 # [EB, NB]
    gsrc = jnp.where(src_match, 1.0, 0.0)                                       # src-row gather op
    gdst = jnp.where(lane_nb == drow, 1.0, 0.0)                                 # dst-row gather op
    gdn = jnp.where(lax.broadcasted_iota(jnp.int32, (EB, N), 1) == dnode, 1.0, 0.0)
    ge = jnp.where(lax.broadcasted_iota(jnp.int32, (EB, E), 1) == eidx, 1.0, 0.0)
    ob = jnp.where(lax.broadcasted_iota(jnp.int32, (EB, B), 1) == bidx, 1.0, 0.0)

    # ---------------- Probabilistic_Model: fc + attn_fc folded to one [T,2] ---------
    sd = jnp.dot(feat_ref[...], wfcwa_ref[...], preferred_element_type=f32)     # [NB, 2]
    ssd = jnp.dot(gsrc, sd, preferred_element_type=f32)                         # [EB, 2]
    dsd = jnp.dot(gdst, sd, preferred_element_type=f32)                         # [EB, 2]
    a = ssd[:, 0:1] + dsd[:, 1:2]                                               # attn logits
    a = jnp.where(a >= 0.0, a, 0.01 * a)                                        # leaky_relu

    # per-source-node segment softmax (DGL edge_softmax norm_by='src'), per-segment max
    am = jnp.where(src_match, a, -1e30)                                         # [EB, NB]
    seg_max = jnp.max(am, axis=0, keepdims=True)                                # [1, NB]
    gmax = jnp.sum(jnp.where(src_match, seg_max, 0.0), axis=1, keepdims=True)   # [EB, 1]
    ex = jnp.exp(a - gmax)
    seg_sum = _dot_t(gsrc, ex)                                                  # [NB,1] = gsrc^T @ ex
    denom = jnp.dot(gsrc, seg_sum, preferred_element_type=f32)                  # [EB, 1]
    atten = ex * pl.reciprocal(denom, approx=True)

    # ---------------- Velocity_Model_NAM: both branches in one MXU pass -------------
    h = jnp.dot(xud_ref[...], w1_ref[...], preferred_element_type=f32) + nrm_ref[0:1, :]
    # dropout(0.5): identity (eval mode)
    lane_h = lax.broadcasted_iota(jnp.int32, (EB, H2), 1)
    up_half = lane_h < H
    r2 = lax.broadcasted_iota(jnp.int32, (H2, 2), 0)
    c2 = lax.broadcasted_iota(jnp.int32, (H2, 2), 1)
    sel = jnp.where((r2 < H) == (c2 == 0), 1.0, 0.0)                            # [H2,2] half selector
    inv_h = 1.0 / float(H)
    mu2 = jnp.dot(h, sel, preferred_element_type=f32) * inv_h                   # per-half mean [EB,2]
    mu = jnp.where(up_half, mu2[:, 0:1], mu2[:, 1:2])
    hc = h - mu
    var2 = jnp.dot(hc * hc, sel, preferred_element_type=f32) * inv_h            # per-half var [EB,2]
    var = jnp.where(up_half, var2[:, 0:1], var2[:, 1:2])
    hn = hc * lax.rsqrt(var + 1e-5) * nrm_ref[1:2, :] + nrm_ref[2:3, :]         # LayerNorm (eps=1e-5)
    hn = jnp.maximum(hn, 0.0)                                                   # ReLU
    y = jnp.dot(hn, w2_ref[...], preferred_element_type=f32) + b2_ref[...]      # [EB, 2]
    sig = pl.reciprocal(1.0 + jnp.exp(-y), approx=True)                         # sigmoid
    w3a = lin3_ref[0]
    w3b = lin3_ref[1]
    b3 = lin3_ref[2]
    v = sig[:, 0:1] * w3a + sig[:, 1:2] * w3b + b3                              # linear3 -> [EB, 1]

    # ---------------- travel time, diffusion sequence, message + reduce -------------
    edist = edata_ref[:, 0:1]
    ealpha = edata_ref[:, 1:2]
    # exact divide here: t_travel feeds the discontinuous round() bin below.
    t_travel = edist / (v + 1e-5)                                               # [EB, 1]
    t_idx = jnp.round(t_travel / time_units)
    t_idx = jnp.where(t_idx < 0.0, 0.0, t_idx)
    # NOTE: t_idx == TT stays unclamped (n then saturates to 1), matching the PyTorch source.
    t_idx = jnp.where(t_idx > ttf, ttf - 1.0, t_idx)
    n = jnp.maximum(ttf - t_idx, 1.0)                                           # diffusion length

    F = pl.reciprocal(1.0 + ealpha * t_travel, approx=True)                     # [EB, 1]
    base = 1.0 - F
    t_iota = lax.broadcasted_iota(jnp.int32, (EB, TT), 1)
    t_f = t_iota.astype(f32)
    expo_i = jnp.maximum(n - 1.0 - t_f, 0.0).astype(jnp.int32)                  # [EB, TT]
    # (1-F)^expo via binary exponentiation on the VPU (no EUP traffic, exact integer power).
    pw = jnp.ones((EB, TT), f32)
    cur = base                                                                  # [EB, 1]
    nbits = max(1, (TT - 1).bit_length())
    for bit in range(nbits):
        pw = jnp.where(((expo_i >> bit) & 1) == 1, pw * cur, pw)
        if bit + 1 < nbits:
            cur = cur * cur
    diffseq = jnp.where(t_f < n, F * pw, 0.0)                                   # padded diffusion seq

    feat_src = jnp.dot(gsrc, feat_ref[...], preferred_element_type=f32)         # src feature gather [EB,T]
    contrib = jnp.sum(diffseq * feat_src, axis=-1, keepdims=True)               # sum over time [EB,1]
    c = atten * contrib

    # dst scatter-add + reshape-to-(N,B) fused into one matmul -> lane-dense stores
    pred_ref[...] = _dot_t(gdn, c * ob)                                         # [N, B]
    v_ref[...] = _dot_t(ge, v * ob)                                             # [E, B]


# --------------------------------------------------------------------------- packing (once)

def pack_params(p):
    """Fold / block-diagonalize weights once (hoisted out of the per-call path)."""
    T, H = p["w11"].shape
    w1c = jnp.zeros((2 * T, 2 * H), jnp.float32)
    w1c = w1c.at[:T, :H].set(p["w11"]).at[T:, H:].set(p["w21"])
    nrm = jnp.stack([
        jnp.concatenate([p["b11"], p["b21"]], axis=-1)[0],
        jnp.concatenate([p["g11"], p["g21"]], axis=-1)[0],
        jnp.concatenate([p["be11"], p["be21"]], axis=-1)[0]], axis=0)            # [3, 2H]
    w2c = jnp.zeros((2 * H, 2), jnp.float32)
    w2c = w2c.at[:H, 0:1].set(p["w12"]).at[H:, 1:2].set(p["w22"])
    b2c = jnp.concatenate([p["b12"], p["b22"]], axis=-1)                          # [1, 2]
    wa = jnp.concatenate([p["wa_src"], p["wa_dst"]], axis=-1)                     # [64, 2]
    wfc_wa = jnp.dot(p["wfc"], wa, precision=lax.Precision.HIGHEST)               # [T, 2] (both bias-free)
    lin3 = jnp.concatenate([p["w3a"].reshape(1), p["w3b"].reshape(1),
                            p["b3"].reshape(1)]).astype(jnp.float32)
    return dict(w1c=w1c, nrm=nrm, w2c=w2c, b2c=b2c, wfc_wa=wfc_wa, lin3=lin3)


def pack_graph(src, dst, batch):
    """Per-(edge,batch)-row int32 index columns: srcrow, dstrow, dstnode, edge, batch."""
    E = src.shape[0]
    b = jnp.arange(batch, dtype=jnp.int32)
    srow = (src.astype(jnp.int32)[:, None] * batch + b[None, :]).reshape(-1)
    drow = (dst.astype(jnp.int32)[:, None] * batch + b[None, :]).reshape(-1)
    dnode = jnp.repeat(dst.astype(jnp.int32), batch)
    eidx = jnp.repeat(jnp.arange(E, dtype=jnp.int32), batch)
    bidx = jnp.tile(b, E)
    return jnp.stack([srow, drow, dnode, eidx, bidx], axis=1)                     # [E*B, 5]


# --------------------------------------------------------------------------- wrapper

def diffusion_model_forward(packed, idx, features, distance, alpha,
                            upstream, downstream, num_timesteps_input, time_units):
    N, B, T = features.shape
    E = upstream.shape[0]
    NB, EB = N * B, E * B

    # pure layout plumbing (no heavy intermediates in HBM)
    feat2d = features.reshape(NB, T)
    xud = jnp.concatenate([upstream.reshape(EB, T), downstream.reshape(EB, T)], axis=-1)
    edata = jnp.stack([jnp.repeat(distance.astype(jnp.float32), B),
                       jnp.repeat(alpha.reshape(E).astype(jnp.float32), B)], axis=1)

    kernel = functools.partial(fused_diffusion_kernel,
                               time_units=float(time_units),
                               num_timesteps_input=int(num_timesteps_input))

    vmem = pl.BlockSpec(memory_space=pltpu.MemorySpace.VMEM)
    smem = pl.BlockSpec(memory_space=pltpu.MemorySpace.SMEM)

    pred, v = pl.pallas_call(
        kernel,
        out_shape=(jax.ShapeDtypeStruct((N, B), jnp.float32),
                   jax.ShapeDtypeStruct((E, B), jnp.float32)),
        in_specs=[smem] + [vmem] * 9,
        out_specs=(vmem, vmem),
        compiler_params=pltpu.CompilerParams(vmem_limit_bytes=32 * 1024 * 1024),
    )(packed["lin3"], feat2d, xud, idx, edata,
      packed["wfc_wa"], packed["w1c"], packed["nrm"], packed["w2c"], packed["b2c"])

    return pred, v


# --------------------------------------------------------------------------- references

_HI = lax.Precision.HIGHEST


def reference_velocity(p, upstream, downstream):
    E, B, T = upstream.shape

    def branch(x, w1, b1, g, be, w2, b2):
        h = jnp.dot(x, w1, precision=_HI) + b1
        mu = jnp.mean(h, axis=-1, keepdims=True)
        var = jnp.mean((h - mu) ** 2, axis=-1, keepdims=True)
        h = (h - mu) / jnp.sqrt(var + 1e-5) * g + be
        h = jnp.maximum(h, 0.0)
        return jax.nn.sigmoid(jnp.dot(h, w2, precision=_HI) + b2)

    xu = branch(upstream.reshape(E * B, T), p["w11"], p["b11"], p["g11"], p["be11"], p["w12"], p["b12"])
    xd = branch(downstream.reshape(E * B, T), p["w21"], p["b21"], p["g21"], p["be21"], p["w22"], p["b22"])
    v = xu * p["w3a"][0, 0] + xd * p["w3b"][0, 0] + p["b3"][0, 0]
    return v.reshape(E, B)


def reference_pred_given_v(p, src, dst, features, distance, alpha, v, TT, time_units):
    """Full pipeline with the velocity supplied (kills round() bin-flip sensitivity)."""
    N, B, T = features.shape
    emb = jnp.dot(features.reshape(N * B, T), p["wfc"], precision=_HI)
    s = jnp.dot(emb, p["wa_src"], precision=_HI).reshape(N, B)
    d = jnp.dot(emb, p["wa_dst"], precision=_HI).reshape(N, B)
    a = s[src] + d[dst]
    a = jnp.where(a >= 0, a, 0.01 * a)
    seg_max = jax.ops.segment_max(a, src, num_segments=N)
    ex = jnp.exp(a - seg_max[src])
    seg_sum = jax.ops.segment_sum(ex, src, num_segments=N)
    atten = ex / seg_sum[src]

    t_travel = distance[:, None] / (v + 1e-5)
    t_idx = jnp.round(t_travel / time_units)
    t_idx = jnp.where(t_idx < 0, 0.0, t_idx)
    t_idx = jnp.where(t_idx > TT, float(TT - 1), t_idx)
    n = jnp.maximum(float(TT) - t_idx, 1.0)

    F = 1.0 / (1.0 + alpha * t_travel)
    t = jnp.arange(T, dtype=jnp.float32)[None, None, :]
    expo = jnp.maximum(n[:, :, None] - 1.0 - t, 0.0)
    diffseq = jnp.where(t < n[:, :, None],
                        F[:, :, None] * jnp.power((1.0 - F)[:, :, None], expo), 0.0)
    contrib = jnp.sum(diffseq * features[src], axis=-1)
    c = atten * contrib
    return jax.ops.segment_sum(c, dst, num_segments=N)


# --------------------------------------------------------------------------- main

if __name__ == "__main__":
    N_NODES, N_EDGES, BATCH, T_IN = 5, 8, 4, 8
    H_V, H_P = 32, 64
    TIME_UNITS = 10.0

    key = jax.random.PRNGKey(0)
    ks = jax.random.split(key, 20)

    # synthetic graph (every node has in- and out-edges)
    src = jnp.array([0, 1, 2, 3, 4, 0, 1, 2], dtype=jnp.int32)
    dst = jnp.array([1, 2, 3, 4, 0, 2, 3, 4], dtype=jnp.int32)

    features = jax.random.normal(ks[0], (N_NODES, BATCH, T_IN), jnp.float32)   # g.ndata['feature']
    distance = jax.random.uniform(ks[1], (N_EDGES,), jnp.float32, 1.0, 30.0)   # g.edata['distance']
    alpha = jnp.ones((N_EDGES, 1), jnp.float32)                                # nn.Parameter
    upstream_flows = jax.random.normal(ks[2], (N_EDGES, BATCH, T_IN), jnp.float32)
    downstream_flows = jax.random.normal(ks[3], (N_EDGES, BATCH, T_IN), jnp.float32)

    def nrm(k, shape):
        return 0.1 * jax.random.normal(k, shape, jnp.float32)

    params = {
        # Velocity_Model_NAM (hidden_units=32); weights stored [in, out]
        "w11": nrm(ks[4], (T_IN, H_V)), "b11": nrm(ks[5], (1, H_V)),
        "g11": jnp.ones((1, H_V), jnp.float32), "be11": jnp.zeros((1, H_V), jnp.float32),
        "w12": nrm(ks[6], (H_V, 1)), "b12": nrm(ks[7], (1, 1)),
        "w21": nrm(ks[8], (T_IN, H_V)), "b21": nrm(ks[9], (1, H_V)),
        "g21": jnp.ones((1, H_V), jnp.float32), "be21": jnp.zeros((1, H_V), jnp.float32),
        "w22": nrm(ks[10], (H_V, 1)), "b22": nrm(ks[11], (1, 1)),
        "w3a": nrm(ks[12], (1, 1)), "w3b": nrm(ks[13], (1, 1)),
        "b3": jnp.full((1, 1), 0.5, jnp.float32),     # keeps velocities positive -> T finite
        # Probabilistic_Model (hidden_units=64): fc (no bias) + attn_fc (no bias, 2H -> 1)
        "wfc": nrm(ks[14], (T_IN, H_P)),
        "wa_src": nrm(ks[15], (H_P, 1)),
        "wa_dst": nrm(ks[16], (H_P, 1)),
    }

    # one-time packing (hoisted out of the per-call path)
    packed = pack_params(params)
    idx = pack_graph(src, dst, BATCH)

    pred, v = diffusion_model_forward(packed, idx, features, distance, alpha,
                                      upstream_flows, downstream_flows, T_IN, TIME_UNITS)
    pred, v = jax.block_until_ready((pred, v))
    assert pred.shape == (N_NODES, BATCH)
    assert v.shape == (N_EDGES, BATCH)

    # 1) velocity sub-model vs an independent high-precision reference (continuous path).
    v_ref = reference_velocity(params, upstream_flows, downstream_flows)
    err_v = np.max(np.abs(np.asarray(v) - np.asarray(v_ref)))
    assert np.allclose(np.asarray(v), np.asarray(v_ref), rtol=5e-3, atol=5e-3), (
        f"velocity mismatch: max abs diff {err_v}")

    # 2) full pipeline vs a reference with the velocity pinned to the kernel's value:
    #    round(T/time_units) is discontinuous, so an independently recomputed velocity could
    #    legitimately flip a diffusion-length bin on benign precision differences; pinning v
    #    makes this check math-equivalent, and the tolerance absorbs the approx-reciprocal /
    #    folded-weight rounding differences.
    pred_ref = reference_pred_given_v(params, src, dst, features, distance, alpha,
                                      v, T_IN, TIME_UNITS)
    err_p = np.max(np.abs(np.asarray(pred) - np.asarray(pred_ref)))
    assert np.allclose(np.asarray(pred), np.asarray(pred_ref), rtol=2e-2, atol=2e-2), (
        f"prediction mismatch: max abs diff {err_p}")

    print("KERNEL_OK")
</pallas_src>

<mosaic_0001>
module attributes {stable_mosaic.version = 11 : i64} {
  func.func @fused_diffusion_kernel(%arg0: memref<3xf32, #tpu.memory_space<smem>>, %arg1: memref<20x8xf32, #tpu.memory_space<vmem>>, %arg2: memref<32x16xf32, #tpu.memory_space<vmem>>, %arg3: memref<32x5xi32, #tpu.memory_space<vmem>>, %arg4: memref<32x2xf32, #tpu.memory_space<vmem>>, %arg5: memref<8x2xf32, #tpu.memory_space<vmem>>, %arg6: memref<16x64xf32, #tpu.memory_space<vmem>>, %arg7: memref<3x64xf32, #tpu.memory_space<vmem>>, %arg8: memref<64x2xf32, #tpu.memory_space<vmem>>, %arg9: memref<1x2xf32, #tpu.memory_space<vmem>>, %arg10: memref<5x4xf32, #tpu.memory_space<vmem>>, %arg11: memref<8x4xf32, #tpu.memory_space<vmem>>) attributes {dimension_semantics = [], scalar_prefetch = 0 : i64, scratch_operands = 0 : i64, tpu.core_type = #tpu.core_type<tc>} {
    %c0 = arith.constant 0 : index
    %c0_0 = arith.constant 0 : index
    %0 = vector.load %arg3[%c0, %c0_0] : memref<32x5xi32, #tpu.memory_space<vmem>>, vector<32x5xi32>
    %1 = vector.extract_strided_slice %0 {offsets = [0, 0], sizes = [32, 1], strides = [1, 1]} : vector<32x5xi32> to vector<32x1xi32>
    %2 = vector.extract_strided_slice %0 {offsets = [0, 1], sizes = [32, 1], strides = [1, 1]} : vector<32x5xi32> to vector<32x1xi32>
    %3 = vector.extract_strided_slice %0 {offsets = [0, 2], sizes = [32, 1], strides = [1, 1]} : vector<32x5xi32> to vector<32x1xi32>
    %4 = vector.extract_strided_slice %0 {offsets = [0, 3], sizes = [32, 1], strides = [1, 1]} : vector<32x5xi32> to vector<32x1xi32>
    %5 = vector.extract_strided_slice %0 {offsets = [0, 4], sizes = [32, 1], strides = [1, 1]} : vector<32x5xi32> to vector<32x1xi32>
    %6 = tpu.iota {dimensions = array<i32: 1>} : vector<32x20xi32>
    %7 = vector.broadcast %1 : vector<32x1xi32> to vector<32x20xi32>
    %8 = arith.cmpi eq, %6, %7 : vector<32x20xi32>
    %cst = arith.constant 1.000000e+00 : f32
    %cst_1 = arith.constant 0.000000e+00 : f32
    %9 = vector.broadcast %cst : f32 to vector<32x20xf32>
    %10 = vector.broadcast %cst_1 : f32 to vector<32x20xf32>
    %11 = arith.select %8, %9, %10 : vector<32x20xi1>, vector<32x20xf32>
    %12 = vector.broadcast %2 : vector<32x1xi32> to vector<32x20xi32>
    %13 = arith.cmpi eq, %6, %12 : vector<32x20xi32>
    %cst_2 = arith.constant 1.000000e+00 : f32
    %cst_3 = arith.constant 0.000000e+00 : f32
    %14 = vector.broadcast %cst_2 : f32 to vector<32x20xf32>
    %15 = vector.broadcast %cst_3 : f32 to vector<32x20xf32>
    %16 = arith.select %13, %14, %15 : vector<32x20xi1>, vector<32x20xf32>
    %17 = tpu.iota {dimensions = array<i32: 1>} : vector<32x5xi32>
    %18 = vector.broadcast %3 : vector<32x1xi32> to vector<32x5xi32>
    %19 = arith.cmpi eq, %17, %18 : vector<32x5xi32>
    %cst_4 = arith.constant 1.000000e+00 : f32
    %cst_5 = arith.constant 0.000000e+00 : f32
    %20 = vector.broadcast %cst_4 : f32 to vector<32x5xf32>
    %21 = vector.broadcast %cst_5 : f32 to vector<32x5xf32>
    %22 = arith.select %19, %20, %21 : vector<32x5xi1>, vector<32x5xf32>
    %23 = tpu.iota {dimensions = array<i32: 1>} : vector<32x8xi32>
    %24 = vector.broadcast %4 : vector<32x1xi32> to vector<32x8xi32>
    %25 = arith.cmpi eq, %23, %24 : vector<32x8xi32>
    %cst_6 = arith.constant 1.000000e+00 : f32
    %cst_7 = arith.constant 0.000000e+00 : f32
    %26 = vector.broadcast %cst_6 : f32 to vector<32x8xf32>
    %27 = vector.broadcast %cst_7 : f32 to vector<32x8xf32>
    %28 = arith.select %25, %26, %27 : vector<32x8xi1>, vector<32x8xf32>
    %29 = tpu.iota {dimensions = array<i32: 1>} : vector<32x4xi32>
    %30 = vector.broadcast %5 : vector<32x1xi32> to vector<32x4xi32>
    %31 = arith.cmpi eq, %29, %30 : vector<32x4xi32>
    %cst_8 = arith.constant 1.000000e+00 : f32
    %cst_9 = arith.constant 0.000000e+00 : f32
    %32 = vector.broadcast %cst_8 : f32 to vector<32x4xf32>
    %33 = vector.broadcast %cst_9 : f32 to vector<32x4xf32>
    %34 = arith.select %31, %32, %33 : vector<32x4xi1>, vector<32x4xf32>
    %c0_10 = arith.constant 0 : index
    %c0_11 = arith.constant 0 : index
    %35 = vector.load %arg1[%c0_10, %c0_11] : memref<20x8xf32, #tpu.memory_space<vmem>>, vector<20x8xf32>
    %c0_12 = arith.constant 0 : index
    %c0_13 = arith.constant 0 : index
    %36 = vector.load %arg5[%c0_12, %c0_13] : memref<8x2xf32, #tpu.memory_space<vmem>>, vector<8x2xf32>
    %cst_14 = arith.constant dense<0.000000e+00> : vector<20x2xf32>
    %37 = tpu.matmul %35, %36, %cst_14 {dimension_numbers = #tpu.dot_dimension_numbers<[1], [0], [0], [1], [0, 0, 1, 1], [], []>} : vector<20x8xf32>, vector<8x2xf32>, vector<20x2xf32> -> vector<20x2xf32>
    %cst_15 = arith.constant dense<0.000000e+00> : vector<32x2xf32>
    %38 = tpu.matmul %11, %37, %cst_15 {dimension_numbers = #tpu.dot_dimension_numbers<[1], [0], [0], [1], [0, 0, 1, 1], [], []>} : vector<32x20xf32>, vector<20x2xf32>, vector<32x2xf32> -> vector<32x2xf32>
    %cst_16 = arith.constant dense<0.000000e+00> : vector<32x2xf32>
    %39 = tpu.matmul %16, %37, %cst_16 {dimension_numbers = #tpu.dot_dimension_numbers<[1], [0], [0], [1], [0, 0, 1, 1], [], []>} : vector<32x20xf32>, vector<20x2xf32>, vector<32x2xf32> -> vector<32x2xf32>
    %40 = vector.extract_strided_slice %38 {offsets = [0, 0], sizes = [32, 1], strides = [1, 1]} : vector<32x2xf32> to vector<32x1xf32>
    %41 = vector.extract_strided_slice %39 {offsets = [0, 1], sizes = [32, 1], strides = [1, 1]} : vector<32x2xf32> to vector<32x1xf32>
    %42 = arith.addf %40, %41 : vector<32x1xf32>
    %cst_17 = arith.constant 0.000000e+00 : f32
    %43 = vector.broadcast %cst_17 : f32 to vector<32x1xf32>
    %44 = arith.cmpf oge, %42, %43 : vector<32x1xf32>
    %cst_18 = arith.constant 0.00999999977 : f32
    %45 = vector.broadcast %cst_18 : f32 to vector<32x1xf32>
    %46 = arith.mulf %45, %42 : vector<32x1xf32>
    %47 = arith.select %44, %42, %46 : vector<32x1xi1>, vector<32x1xf32>
    %cst_19 = arith.constant -1.000000e+30 : f32
    %48 = vector.shape_cast %47 : vector<32x1xf32> to vector<32x1xf32>
    %49 = vector.broadcast %48 : vector<32x1xf32> to vector<32x20xf32>
    %50 = vector.broadcast %cst_19 : f32 to vector<32x20xf32>
    %51 = arith.select %8, %49, %50 : vector<32x20xi1>, vector<32x20xf32>
    %cst_20 = arith.constant dense<0xFF800000> : vector<20xf32>
    %52 = vector.multi_reduction <maximumf>, %51, %cst_20 [0] : vector<32x20xf32> to vector<20xf32>
    %53 = vector.shape_cast %52 : vector<20xf32> to vector<1x20xf32>
    %cst_21 = arith.constant 0.000000e+00 : f32
    %54 = vector.shape_cast %53 : vector<1x20xf32> to vector<1x20xf32>
    %55 = vector.broadcast %54 : vector<1x20xf32> to vector<32x20xf32>
    %56 = vector.broadcast %cst_21 : f32 to vector<32x20xf32>
    %57 = arith.select %8, %55, %56 : vector<32x20xi1>, vector<32x20xf32>
    %cst_22 = arith.constant dense<0.000000e+00> : vector<32xf32>
    %58 = vector.multi_reduction <add>, %57, %cst_22 [1] : vector<32x20xf32> to vector<32xf32>
    %59 = vector.shape_cast %58 : vector<32xf32> to vector<32x1xf32>
    %60 = arith.subf %47, %59 : vector<32x1xf32>
    %61 = math.exp %60 : vector<32x1xf32>
    %cst_23 = arith.constant dense<0.000000e+00> : vector<20x1xf32>
    %62 = tpu.matmul %11, %61, %cst_23 {dimension_numbers = #tpu.dot_dimension_numbers<[0], [0], [1], [1], [0, 1, 1, 1], [], []>} : vector<32x20xf32>, vector<32x1xf32>, vector<20x1xf32> -> vector<20x1xf32>
    %cst_24 = arith.constant dense<0.000000e+00> : vector<32x1xf32>
    %63 = tpu.matmul %11, %62, %cst_24 {dimension_numbers = #tpu.dot_dimension_numbers<[1], [0], [0], [1], [0, 0, 1, 1], [], []>} : vector<32x20xf32>, vector<20x1xf32>, vector<32x1xf32> -> vector<32x1xf32>
    %64 = tpu.reciprocal %63 {approx = true} : vector<32x1xf32> -> vector<32x1xf32>
    %65 = arith.mulf %61, %64 : vector<32x1xf32>
    %c0_25 = arith.constant 0 : index
    %c0_26 = arith.constant 0 : index
    %66 = vector.load %arg2[%c0_25, %c0_26] : memref<32x16xf32, #tpu.memory_space<vmem>>, vector<32x16xf32>
    %c0_27 = arith.constant 0 : index
    %c0_28 = arith.constant 0 : index
    %67 = vector.load %arg6[%c0_27, %c0_28] : memref<16x64xf32, #tpu.memory_space<vmem>>, vector<16x64xf32>
    %cst_29 = arith.constant dense<0.000000e+00> : vector<32x64xf32>
    %68 = tpu.matmul %66, %67, %cst_29 {dimension_numbers = #tpu.dot_dimension_numbers<[1], [0], [0], [1], [0, 0, 1, 1], [], []>} : vector<32x16xf32>, vector<16x64xf32>, vector<32x64xf32> -> vector<32x64xf32>
    %c0_30 = arith.constant 0 : index
    %c0_31 = arith.constant 0 : index
    %69 = vector.load %arg7[%c0_30, %c0_31] : memref<3x64xf32, #tpu.memory_space<vmem>>, vector<1x64xf32>
    %70 = vector.broadcast %69 : vector<1x64xf32> to vector<32x64xf32>
    %71 = arith.addf %68, %70 : vector<32x64xf32>
    %72 = tpu.iota {dimensions = array<i32: 1>} : vector<32x64xi32>
    %c32_i32 = arith.constant 32 : i32
    %73 = vector.broadcast %c32_i32 : i32 to vector<32x64xi32>
    %74 = arith.cmpi slt, %72, %73 : vector<32x64xi32>
    %75 = tpu.iota {dimensions = array<i32: 0>} : vector<64x2xi32>
    %76 = tpu.iota {dimensions = array<i32: 1>} : vector<64x2xi32>
    %c32_i32_32 = arith.constant 32 : i32
    %77 = vector.broadcast %c32_i32_32 : i32 to vector<64x2xi32>
    %78 = arith.cmpi slt, %75, %77 : vector<64x2xi32>
    %c0_i32 = arith.constant 0 : i32
    %79 = vector.broadcast %c0_i32 : i32 to vector<64x2xi32>
    %80 = arith.cmpi eq, %76, %79 : vector<64x2xi32>
    %81 = arith.xori %78, %80 : vector<64x2xi1>
    %cst_33 = arith.constant dense<true> : vector<64x2xi1>
    %82 = arith.xori %81, %cst_33 : vector<64x2xi1>
    %cst_34 = arith.constant 1.000000e+00 : f32
    %cst_35 = arith.constant 0.000000e+00 : f32
    %83 = vector.broadcast %cst_34 : f32 to vector<64x2xf32>
    %84 = vector.broadcast %cst_35 : f32 to vector<64x2xf32>
    %85 = arith.select %82, %83, %84 : vector<64x2xi1>, vector<64x2xf32>
    %cst_36 = arith.constant dense<0.000000e+00> : vector<32x2xf32>
    %86 = tpu.matmul %71, %85, %cst_36 {dimension_numbers = #tpu.dot_dimension_numbers<[1], [0], [0], [1], [0, 0, 1, 1], [], []>} : vector<32x64xf32>, vector<64x2xf32>, vector<32x2xf32> -> vector<32x2xf32>
    %cst_37 = arith.constant 3.125000e-02 : f32
    %87 = vector.broadcast %cst_37 : f32 to vector<32x2xf32>
    %88 = arith.mulf %86, %87 : vector<32x2xf32>
    %89 = vector.extract_strided_slice %88 {offsets = [0, 0], sizes = [32, 1], strides = [1, 1]} : vector<32x2xf32> to vector<32x1xf32>
    %90 = vector.extract_strided_slice %88 {offsets = [0, 1], sizes = [32, 1], strides = [1, 1]} : vector<32x2xf32> to vector<32x1xf32>
    %91 = vector.shape_cast %89 : vector<32x1xf32> to vector<32x1xf32>
    %92 = vector.broadcast %91 : vector<32x1xf32> to vector<32x64xf32>
    %93 = vector.shape_cast %90 : vector<32x1xf32> to vector<32x1xf32>
    %94 = vector.broadcast %93 : vector<32x1xf32> to vector<32x64xf32>
    %95 = arith.select %74, %92, %94 : vector<32x64xi1>, vector<32x64xf32>
    %96 = arith.subf %71, %95 : vector<32x64xf32>
    %97 = arith.mulf %96, %96 : vector<32x64xf32>
    %cst_38 = arith.constant dense<0.000000e+00> : vector<32x2xf32>
    %98 = tpu.matmul %97, %85, %cst_38 {dimension_numbers = #tpu.dot_dimension_numbers<[1], [0], [0], [1], [0, 0, 1, 1], [], []>} : vector<32x64xf32>, vector<64x2xf32>, vector<32x2xf32> -> vector<32x2xf32>
    %cst_39 = arith.constant 3.125000e-02 : f32
    %99 = vector.broadcast %cst_39 : f32 to vector<32x2xf32>
    %100 = arith.mulf %98, %99 : vector<32x2xf32>
    %101 = vector.extract_strided_slice %100 {offsets = [0, 0], sizes = [32, 1], strides = [1, 1]} : vector<32x2xf32> to vector<32x1xf32>
    %102 = vector.extract_strided_slice %100 {offsets = [0, 1], sizes = [32, 1], strides = [1, 1]} : vector<32x2xf32> to vector<32x1xf32>
    %103 = vector.shape_cast %101 : vector<32x1xf32> to vector<32x1xf32>
    %104 = vector.broadcast %103 : vector<32x1xf32> to vector<32x64xf32>
    %105 = vector.shape_cast %102 : vector<32x1xf32> to vector<32x1xf32>
    %106 = vector.broadcast %105 : vector<32x1xf32> to vector<32x64xf32>
    %107 = arith.select %74, %104, %106 : vector<32x64xi1>, vector<32x64xf32>
    %cst_40 = arith.constant 9.99999974E-6 : f32
    %108 = vector.broadcast %cst_40 : f32 to vector<32x64xf32>
    %109 = arith.addf %107, %108 : vector<32x64xf32>
    %110 = math.rsqrt %109 : vector<32x64xf32>
    %111 = arith.mulf %96, %110 : vector<32x64xf32>
    %c1 = arith.constant 1 : index
    %c0_41 = arith.constant 0 : index
    %112 = vector.load %arg7[%c1, %c0_41] : memref<3x64xf32, #tpu.memory_space<vmem>>, vector<1x64xf32>
    %113 = vector.broadcast %112 : vector<1x64xf32> to vector<32x64xf32>
    %114 = arith.mulf %111, %113 : vector<32x64xf32>
    %c2 = arith.constant 2 : index
    %c0_42 = arith.constant 0 : index
    %115 = vector.load %arg7[%c2, %c0_42] : memref<3x64xf32, #tpu.memory_space<vmem>>, vector<1x64xf32>
    %116 = vector.broadcast %115 : vector<1x64xf32> to vector<32x64xf32>
    %117 = arith.addf %114, %116 : vector<32x64xf32>
    %cst_43 = arith.constant 0.000000e+00 : f32
    %118 = vector.broadcast %cst_43 : f32 to vector<32x64xf32>
    %119 = arith.maximumf %117, %118 : vector<32x64xf32>
    %c0_44 = arith.constant 0 : index
    %c0_45 = arith.constant 0 : index
    %120 = vector.load %arg8[%c0_44, %c0_45] : memref<64x2xf32, #tpu.memory_space<vmem>>, vector<64x2xf32>
    %cst_46 = arith.constant dense<0.000000e+00> : vector<32x2xf32>
    %121 = tpu.matmul %119, %120, %cst_46 {dimension_numbers = #tpu.dot_dimension_numbers<[1], [0], [0], [1], [0, 0, 1, 1], [], []>} : vector<32x64xf32>, vector<64x2xf32>, vector<32x2xf32> -> vector<32x2xf32>
    %c0_47 = arith.constant 0 : index
    %c0_48 = arith.constant 0 : index
    %122 = vector.load %arg9[%c0_47, %c0_48] : memref<1x2xf32, #tpu.memory_space<vmem>>, vector<1x2xf32>
    %123 = vector.broadcast %122 : vector<1x2xf32> to vector<32x2xf32>
    %124 = arith.addf %121, %123 : vector<32x2xf32>
    %cst_49 = arith.constant 0.000000e+00 : f32
    %125 = vector.broadcast %cst_49 : f32 to vector<32x2xf32>
    %126 = arith.subf %125, %124 : vector<32x2xf32>
    %127 = math.exp %126 : vector<32x2xf32>
    %cst_50 = arith.constant 1.000000e+00 : f32
    %128 = vector.broadcast %cst_50 : f32 to vector<32x2xf32>
    %129 = arith.addf %128, %127 : vector<32x2xf32>
    %130 = tpu.reciprocal %129 {approx = true} : vector<32x2xf32> -> vector<32x2xf32>
    %c0_51 = arith.constant 0 : index
    %131 = memref.load %arg0[%c0_51] : memref<3xf32, #tpu.memory_space<smem>>
    %c1_52 = arith.constant 1 : index
    %132 = memref.load %arg0[%c1_52] : memref<3xf32, #tpu.memory_space<smem>>
    %c2_53 = arith.constant 2 : index
    %133 = memref.load %arg0[%c2_53] : memref<3xf32, #tpu.memory_space<smem>>
    %134 = vector.extract_strided_slice %130 {offsets = [0, 0], sizes = [32, 1], strides = [1, 1]} : vector<32x2xf32> to vector<32x1xf32>
    %135 = vector.broadcast %131 : f32 to vector<32x1xf32>
    %136 = arith.mulf %134, %135 : vector<32x1xf32>
    %137 = vector.extract_strided_slice %130 {offsets = [0, 1], sizes = [32, 1], strides = [1, 1]} : vector<32x2xf32> to vector<32x1xf32>
    %138 = vector.broadcast %132 : f32 to vector<32x1xf32>
    %139 = arith.mulf %137, %138 : vector<32x1xf32>
    %140 = arith.addf %136, %139 : vector<32x1xf32>
    %141 = vector.broadcast %133 : f32 to vector<32x1xf32>
    %142 = arith.addf %140, %141 : vector<32x1xf32>
    %c0_54 = arith.constant 0 : index
    %c0_55 = arith.constant 0 : index
    %143 = vector.load %arg4[%c0_54, %c0_55] : memref<32x2xf32, #tpu.memory_space<vmem>>, vector<32x1xf32>
    %c0_56 = arith.constant 0 : index
    %c1_57 = arith.constant 1 : index
    %144 = vector.load %arg4[%c0_56, %c1_57] : memref<32x2xf32, #tpu.memory_space<vmem>>, vector<32x1xf32>
    %cst_58 = arith.constant 9.99999974E-6 : f32
    %145 = vector.broadcast %cst_58 : f32 to vector<32x1xf32>
    %146 = arith.addf %142, %145 : vector<32x1xf32>
    %147 = arith.divf %143, %146 : vector<32x1xf32>
    %cst_59 = arith.constant 1.000000e+01 : f32
    %148 = vector.broadcast %cst_59 : f32 to vector<32x1xf32>
    %149 = arith.divf %147, %148 : vector<32x1xf32>
    %150 = math.roundeven %149 : vector<32x1xf32>
    %cst_60 = arith.constant 0.000000e+00 : f32
    %151 = vector.broadcast %cst_60 : f32 to vector<32x1xf32>
    %152 = arith.cmpf olt, %150, %151 : vector<32x1xf32>
    %cst_61 = arith.constant 0.000000e+00 : f32
    %153 = vector.broadcast %cst_61 : f32 to vector<32x1xf32>
    %154 = arith.select %152, %153, %150 : vector<32x1xi1>, vector<32x1xf32>
    %cst_62 = arith.constant 8.000000e+00 : f32
    %155 = vector.broadcast %cst_62 : f32 to vector<32x1xf32>
    %156 = arith.cmpf ogt, %154, %155 : vector<32x1xf32>
    %cst_63 = arith.constant 7.000000e+00 : f32
    %157 = vector.broadcast %cst_63 : f32 to vector<32x1xf32>
    %158 = arith.select %156, %157, %154 : vector<32x1xi1>, vector<32x1xf32>
    %cst_64 = arith.constant 8.000000e+00 : f32
    %159 = vector.broadcast %cst_64 : f32 to vector<32x1xf32>
    %160 = arith.subf %159, %158 : vector<32x1xf32>
    %cst_65 = arith.constant 1.000000e+00 : f32
    %161 = vector.broadcast %cst_65 : f32 to vector<32x1xf32>
    %162 = arith.maximumf %160, %161 : vector<32x1xf32>
    %163 = arith.mulf %144, %147 : vector<32x1xf32>
    %cst_66 = arith.constant 1.000000e+00 : f32
    %164 = vector.broadcast %cst_66 : f32 to vector<32x1xf32>
    %165 = arith.addf %164, %163 : vector<32x1xf32>
    %166 = tpu.reciprocal %165 {approx = true} : vector<32x1xf32> -> vector<32x1xf32>
    %cst_67 = arith.constant 1.000000e+00 : f32
    %167 = vector.broadcast %cst_67 : f32 to vector<32x1xf32>
    %168 = arith.subf %167, %166 : vector<32x1xf32>
    %169 = tpu.iota {dimensions = array<i32: 1>} : vector<32x8xi32>
    %170 = arith.sitofp %169 : vector<32x8xi32> to vector<32x8xf32>
    %cst_68 = arith.constant 1.000000e+00 : f32
    %171 = vector.broadcast %cst_68 : f32 to vector<32x1xf32>
    %172 = arith.subf %162, %171 : vector<32x1xf32>
    %173 = vector.broadcast %172 : vector<32x1xf32> to vector<32x8xf32>
    %174 = arith.subf %173, %170 : vector<32x8xf32>
    %cst_69 = arith.constant 0.000000e+00 : f32
    %175 = vector.broadcast %cst_69 : f32 to vector<32x8xf32>
    %176 = arith.maximumf %174, %175 : vector<32x8xf32>
    %177 = arith.fptosi %176 : vector<32x8xf32> to vector<32x8xi32>
    %cst_70 = arith.constant 1.000000e+00 : f32
    %178 = vector.broadcast %cst_70 : f32 to vector<32x8xf32>
    %c0_i32_71 = arith.constant 0 : i32
    %179 = vector.broadcast %c0_i32_71 : i32 to vector<32x8xi32>
    %180 = arith.shrsi %177, %179 : vector<32x8xi32>
    %c1_i32 = arith.constant 1 : i32
    %181 = vector.broadcast %c1_i32 : i32 to vector<32x8xi32>
    %182 = arith.andi %180, %181 : vector<32x8xi32>
    %c1_i32_72 = arith.constant 1 : i32
    %183 = vector.broadcast %c1_i32_72 : i32 to vector<32x8xi32>
    %184 = arith.cmpi eq, %182, %183 : vector<32x8xi32>
    %185 = vector.broadcast %168 : vector<32x1xf32> to vector<32x8xf32>
    %186 = arith.mulf %178, %185 : vector<32x8xf32>
    %187 = arith.select %184, %186, %178 : vector<32x8xi1>, vector<32x8xf32>
    %188 = arith.mulf %168, %168 : vector<32x1xf32>
    %c1_i32_73 = arith.constant 1 : i32
    %189 = vector.broadcast %c1_i32_73 : i32 to vector<32x8xi32>
    %190 = arith.shrsi %177, %189 : vector<32x8xi32>
    %c1_i32_74 = arith.constant 1 : i32
    %191 = vector.broadcast %c1_i32_74 : i32 to vector<32x8xi32>
    %192 = arith.andi %190, %191 : vector<32x8xi32>
    %c1_i32_75 = arith.constant 1 : i32
    %193 = vector.broadcast %c1_i32_75 : i32 to vector<32x8xi32>
    %194 = arith.cmpi eq, %192, %193 : vector<32x8xi32>
    %195 = vector.broadcast %188 : vector<32x1xf32> to vector<32x8xf32>
    %196 = arith.mulf %187, %195 : vector<32x8xf32>
    %197 = arith.select %194, %196, %187 : vector<32x8xi1>, vector<32x8xf32>
    %198 = arith.mulf %188, %188 : vector<32x1xf32>
    %c2_i32 = arith.constant 2 : i32
    %199 = vector.broadcast %c2_i32 : i32 to vector<32x8xi32>
    %200 = arith.shrsi %177, %199 : vector<32x8xi32>
    %c1_i32_76 = arith.constant 1 : i32
    %201 = vector.broadcast %c1_i32_76 : i32 to vector<32x8xi32>
    %202 = arith.andi %200, %201 : vector<32x8xi32>
    %c1_i32_77 = arith.constant 1 : i32
    %203 = vector.broadcast %c1_i32_77 : i32 to vector<32x8xi32>
    %204 = arith.cmpi eq, %202, %203 : vector<32x8xi32>
    %205 = vector.broadcast %198 : vector<32x1xf32> to vector<32x8xf32>
    %206 = arith.mulf %197, %205 : vector<32x8xf32>
    %207 = arith.select %204, %206, %197 : vector<32x8xi1>, vector<32x8xf32>
    %208 = vector.broadcast %162 : vector<32x1xf32> to vector<32x8xf32>
    %209 = arith.cmpf olt, %170, %208 : vector<32x8xf32>
    %210 = vector.broadcast %166 : vector<32x1xf32> to vector<32x8xf32>
    %211 = arith.mulf %210, %207 : vector<32x8xf32>
    %cst_78 = arith.constant 0.000000e+00 : f32
    %212 = vector.broadcast %cst_78 : f32 to vector<32x8xf32>
    %213 = arith.select %209, %211, %212 : vector<32x8xi1>, vector<32x8xf32>
    %c0_79 = arith.constant 0 : index
    %c0_80 = arith.constant 0 : index
    %214 = vector.load %arg1[%c0_79, %c0_80] : memref<20x8xf32, #tpu.memory_space<vmem>>, vector<20x8xf32>
    %cst_81 = arith.constant dense<0.000000e+00> : vector<32x8xf32>
    %215 = tpu.matmul %11, %214, %cst_81 {dimension_numbers = #tpu.dot_dimension_numbers<[1], [0], [0], [1], [0, 0, 1, 1], [], []>} : vector<32x20xf32>, vector<20x8xf32>, vector<32x8xf32> -> vector<32x8xf32>
    %216 = arith.mulf %213, %215 : vector<32x8xf32>
    %cst_82 = arith.constant dense<0.000000e+00> : vector<32xf32>
    %217 = vector.multi_reduction <add>, %216, %cst_82 [1] : vector<32x8xf32> to vector<32xf32>
    %218 = vector.shape_cast %217 : vector<32xf32> to vector<32x1xf32>
    %219 = arith.mulf %65, %218 : vector<32x1xf32>
    %220 = vector.broadcast %219 : vector<32x1xf32> to vector<32x4xf32>
    %221 = arith.mulf %220, %34 : vector<32x4xf32>
    %cst_83 = arith.constant dense<0.000000e+00> : vector<5x4xf32>
    %222 = tpu.matmul %22, %221, %cst_83 {dimension_numbers = #tpu.dot_dimension_numbers<[0], [0], [1], [1], [0, 1, 1, 1], [], []>} : vector<32x5xf32>, vector<32x4xf32>, vector<5x4xf32> -> vector<5x4xf32>
    %c0_84 = arith.constant 0 : index
    %c0_85 = arith.constant 0 : index
    %223 = vector.load %arg10[%c0_84, %c0_85] : memref<5x4xf32, #tpu.memory_space<vmem>>, vector<5x4xf32>
    tpu.vector_store %arg10[%c0_84, %c0_85], %222 {strides = array<i32>} : memref<5x4xf32, #tpu.memory_space<vmem>>, vector<5x4xf32>,
    %224 = vector.broadcast %142 : vector<32x1xf32> to vector<32x4xf32>
    %225 = arith.mulf %224, %34 : vector<32x4xf32>
    %cst_86 = arith.constant dense<0.000000e+00> : vector<8x4xf32>
    %226 = tpu.matmul %28, %225, %cst_86 {dimension_numbers = #tpu.dot_dimension_numbers<[0], [0], [1], [1], [0, 1, 1, 1], [], []>} : vector<32x8xf32>, vector<32x4xf32>, vector<8x4xf32> -> vector<8x4xf32>
    %c0_87 = arith.constant 0 : index
    %c0_88 = arith.constant 0 : index
    %227 = vector.load %arg11[%c0_87, %c0_88] : memref<8x4xf32, #tpu.memory_space<vmem>>, vector<8x4xf32>
    tpu.vector_store %arg11[%c0_87, %c0_88], %226 {strides = array<i32>} : memref<8x4xf32, #tpu.memory_space<vmem>>, vector<8x4xf32>,
    return
  }
}

</mosaic_0001>

<llo_original>
// kernel: tpu_custom_call.1
$region0: #{tpu_custom_call.1}
  #allocation0 [shape = 'u32[]', space=smem, size = 0x4, offset = 0x4, fixed_abs, tag = 'smem constant byte address 0x4 - core index']
  #allocation1 [shape = 'u32[144,128]{1,0:T(1,128)}', space=vmem, size = 0x12000, scoped, tag = 'internal scratch']
  %s0 = inlined_call_operand.vmem [shape: f32[3], index: 0, kind: input, shape index: {}]
  %s1 = inlined_call_operand.vmem [shape: f32[20,8], index: 1, kind: input, shape index: {}]
  %s2 = inlined_call_operand.vmem [shape: f32[32,16], index: 2, kind: input, shape index: {}]
  %s3 = inlined_call_operand.vmem [shape: s32[32,5], index: 3, kind: input, shape index: {}]
  %s4 = inlined_call_operand.vmem [shape: f32[32,2], index: 4, kind: input, shape index: {}]
  %s5 = inlined_call_operand.vmem [shape: f32[8,2], index: 5, kind: input, shape index: {}]
  %s6 = inlined_call_operand.vmem [shape: f32[16,64], index: 6, kind: input, shape index: {}]
  %s7 = inlined_call_operand.vmem [shape: f32[3,64], index: 7, kind: input, shape index: {}]
  %s8 = inlined_call_operand.vmem [shape: f32[64,2], index: 8, kind: input, shape index: {}]
  %s9 = inlined_call_operand.vmem [shape: f32[1,2], index: 9, kind: input, shape index: {}]
  %s10 = inlined_call_operand.vmem [shape: f32[5,4], index: 10, kind: output, shape index: {0}]
  %s11 = inlined_call_operand.vmem [shape: f32[8,4], index: 11, kind: output, shape index: {1}]
  %12 = xla_tuple %s10, %s11
  %s13 = sld [smem:[#allocation0]]
  $region62: #{tpu_custom_call.1} parent=0
    _
  %s15 = ssub.s32 1, %s13
  %s16 = scalar_select 0, %s15, %s13
  $region1: #{tpu_custom_call.1} parent=0
    #allocation2 [shape = 'u8[512]{0}', space=smem, size = 0x200, scoped, tag = 'input window, operand 0, single buffered']
    #allocation3 [shape = 's32[1]{0}', space=sflag, size = 0x4, scoped, tag = 'scoped memory for tpu_custom_call.1']
    %17 = vsyncpa [#allocation3], 0
    // Predicated region
    $region2: #{tpu_custom_call.1} parent=1 // pred_check
      _
    $region3: #{tpu_custom_call.1} parent=1 // pred_check_branch
      %19 = sbr.rel (0) target = $region5
    $region4: #{tpu_custom_call.1} parent=1 // pred_region
      %s21 = ssub.s32 16, 16
      %22 = vsyncadd [#allocation3], %s21
      %s24 = sshll.u32 %s0, 4
      %s25 = int_to_ptr.vmem [resolvable:$true] %s24
      %27 = dma.vmem_to_smem %s25, 16, [#allocation2], [#allocation3]
    $region5: #{tpu_custom_call.1} parent=1 // pred_fallthru
      _
    // Predicated region
    $region6: #{tpu_custom_call.1} parent=1 // pred_check
      _
    $region7: #{tpu_custom_call.1} parent=1 // pred_check_branch
      %29 = sbr.rel (0) target = $region9
    $region8: #{tpu_custom_call.1} parent=1 // pred_region
      _
    $region9: #{tpu_custom_call.1} parent=1 // pred_fallthru
      _
    // Predicated region
    $region10: #{tpu_custom_call.1} parent=1 // pred_check
      _
    $region11: #{tpu_custom_call.1} parent=1 // pred_check_branch
      %31 = sbr.rel (0) target = $region13
    $region12: #{tpu_custom_call.1} parent=1 // pred_region
      _
    $region13: #{tpu_custom_call.1} parent=1 // pred_fallthru
      _
    // Predicated region
    $region14: #{tpu_custom_call.1} parent=1 // pred_check
      _
    $region15: #{tpu_custom_call.1} parent=1 // pred_check_branch
      %33 = sbr.rel (0) target = $region17
    $region16: #{tpu_custom_call.1} parent=1 // pred_region
      _
    $region17: #{tpu_custom_call.1} parent=1 // pred_fallthru
      _
    // Predicated region
    $region18: #{tpu_custom_call.1} parent=1 // pred_check
      _
    $region19: #{tpu_custom_call.1} parent=1 // pred_check_branch
      %35 = sbr.rel (0) target = $region21
    $region20: #{tpu_custom_call.1} parent=1 // pred_region
      _
    $region21: #{tpu_custom_call.1} parent=1 // pred_fallthru
      _
    // Predicated region
    $region22: #{tpu_custom_call.1} parent=1 // pred_check
      _
    $region23: #{tpu_custom_call.1} parent=1 // pred_check_branch
      %37 = sbr.rel (0) target = $region25
    $region24: #{tpu_custom_call.1} parent=1 // pred_region
      _
    $region25: #{tpu_custom_call.1} parent=1 // pred_fallthru
      _
    // Predicated region
    $region26: #{tpu_custom_call.1} parent=1 // pred_check
      _
    $region27: #{tpu_custom_call.1} parent=1 // pred_check_branch
      %39 = sbr.rel (0) target = $region29
    $region28: #{tpu_custom_call.1} parent=1 // pred_region
      _
    $region29: #{tpu_custom_call.1} parent=1 // pred_fallthru
      _
    // Predicated region
    $region30: #{tpu_custom_call.1} parent=1 // pred_check
      _
    $region31: #{tpu_custom_call.1} parent=1 // pred_check_branch
      %41 = sbr.rel (0) target = $region33
    $region32: #{tpu_custom_call.1} parent=1 // pred_region
      _
    $region33: #{tpu_custom_call.1} parent=1 // pred_fallthru
      _
    // Predicated region
    $region34: #{tpu_custom_call.1} parent=1 // pred_check
      _
    $region35: #{tpu_custom_call.1} parent=1 // pred_check_branch
      %43 = sbr.rel (0) target = $region37
    $region36: #{tpu_custom_call.1} parent=1 // pred_region
      _
    $region37: #{tpu_custom_call.1} parent=1 // pred_fallthru
      _
    // Predicated region
    $region38: #{tpu_custom_call.1} parent=1 // pred_check
      _
    $region39: #{tpu_custom_call.1} parent=1 // pred_check_branch
      %45 = sbr.rel (0) target = $region41
    $region40: #{tpu_custom_call.1} parent=1 // pred_region
      _
    $region41: #{tpu_custom_call.1} parent=1 // pred_fallthru
      _
    // Predicated region
    $region42: #{tpu_custom_call.1} parent=1 // pred_check
      _
    $region43: #{tpu_custom_call.1} parent=1 // pred_check_branch
      %47 = sbr.rel (0) target = $region45
    $region44: #{tpu_custom_call.1} parent=1 // pred_region
      %48 = dma.done [#allocation3], 16
    $region45: #{tpu_custom_call.1} parent=1 // pred_fallthru
      _
    %49 = sfence
    %v50 = vld [vmem:[%s3] sm:$0xff]
    %v51 = vld [vmem:[%s3 + $0x8] sm:$0xff]
    %v52 = vld [vmem:[%s3 + $0x10] sm:$0xff]
    %v53 = vld [vmem:[%s3 + $0x18] sm:$0xff]
    %v54 = vlaneseq
    %v55 = vand.u32 %v54, 127
    %56 = vset.pattern.permute.xlu0 0
    %57 = vperm.xlu0 %56, %v50
    %v58 = vpop.permute.xlu0 %57
    %59 = vset.pattern.permute.xlu0 0
    %60 = vperm.xlu0 %59, %v51
    %v61 = vpop.permute.xlu0 %60
    %62 = vset.pattern.permute.xlu0 0
    %63 = vperm.xlu0 %62, %v52
    %v64 = vpop.permute.xlu0 %63
    %65 = vset.pattern.permute.xlu0 0
    %66 = vperm.xlu0 %65, %v53
    %v67 = vpop.permute.xlu0 %66
    %vm68 = vcmp.eq.s32.totalorder %v55, %v58
    %vm69 = vcmp.eq.s32.totalorder %v55, %v61
    %vm70 = vcmp.eq.s32.totalorder %v55, %v64
    %vm71 = vcmp.eq.s32.totalorder %v55, %v67
    %v72 = vsel %vm68, 1.0, 0.0
    %v73 = vsel %vm69, 1.0, 0.0
    %v74 = vsel %vm70, 1.0, 0.0
    %v75 = vsel %vm71, 1.0, 0.0
    %76 = vset.pattern.permute.xlu0 1
    %77 = vperm.xlu0 %76, %v50
    %v78 = vpop.permute.xlu0 %77
    %79 = vset.pattern.permute.xlu0 1
    %80 = vperm.xlu0 %79, %v51
    %v81 = vpop.permute.xlu0 %80
    %82 = vset.pattern.permute.xlu0 1
    %83 = vperm.xlu0 %82, %v52
    %v84 = vpop.permute.xlu0 %83
    %85 = vset.pattern.permute.xlu0 1
    %86 = vperm.xlu0 %85, %v53
    %v87 = vpop.permute.xlu0 %86
    %vm88 = vcmp.eq.s32.totalorder %v55, %v78
    %vm89 = vcmp.eq.s32.totalorder %v55, %v81
    %vm90 = vcmp.eq.s32.totalorder %v55, %v84
    %vm91 = vcmp.eq.s32.totalorder %v55, %v87
    %v92 = vsel %vm88, 1.0, 0.0
    %v93 = vsel %vm89, 1.0, 0.0
    %v94 = vsel %vm90, 1.0, 0.0
    %v95 = vsel %vm91, 1.0, 0.0
    %96 = vset.pattern.permute.xlu0 2
    %97 = vperm.xlu0 %96, %v50
    %v98 = vpop.permute.xlu0 %97
    %99 = vset.pattern.permute.xlu0 2
    %100 = vperm.xlu0 %99, %v51
    %v101 = vpop.permute.xlu0 %100
    %102 = vset.pattern.permute.xlu0 2
    %103 = vperm.xlu0 %102, %v52
    %v104 = vpop.permute.xlu0 %103
    %105 = vset.pattern.permute.xlu0 2
    %106 = vperm.xlu0 %105, %v53
    %v107 = vpop.permute.xlu0 %106
    %vm108 = vcmp.eq.s32.totalorder %v55, %v98
    %vm109 = vcmp.eq.s32.totalorder %v55, %v101
    %vm110 = vcmp.eq.s32.totalorder %v55, %v104
    %vm111 = vcmp.eq.s32.totalorder %v55, %v107
    %v112 = vsel %vm108, 1.0, 0.0
    %v113 = vsel %vm109, 1.0, 0.0
    %v114 = vsel %vm110, 1.0, 0.0
    %v115 = vsel %vm111, 1.0, 0.0
    %116 = vset.pattern.permute.xlu0 3
    %117 = vperm.xlu0 %116, %v50
    %v118 = vpop.permute.xlu0 %117
    %119 = vset.pattern.permute.xlu0 3
    %120 = vperm.xlu0 %119, %v51
    %v121 = vpop.permute.xlu0 %120
    %122 = vset.pattern.permute.xlu0 3
    %123 = vperm.xlu0 %122, %v52
    %v124 = vpop.permute.xlu0 %123
    %125 = vset.pattern.permute.xlu0 3
    %126 = vperm.xlu0 %125, %v53
    %v127 = vpop.permute.xlu0 %126
    %vm128 = vcmp.eq.s32.totalorder %v55, %v118
    %vm129 = vcmp.eq.s32.totalorder %v55, %v121
    %vm130 = vcmp.eq.s32.totalorder %v55, %v124
    %vm131 = vcmp.eq.s32.totalorder %v55, %v127
    %v132 = vsel %vm128, 1.0, 0.0
    %v133 = vsel %vm129, 1.0, 0.0
    %v134 = vsel %vm130, 1.0, 0.0
    %v135 = vsel %vm131, 1.0, 0.0
    %136 = vset.pattern.permute.xlu0 4
    %137 = vperm.xlu0 %136, %v50
    %v138 = vpop.permute.xlu0 %137
    %139 = vset.pattern.permute.xlu0 4
    %140 = vperm.xlu0 %139, %v51
    %v141 = vpop.permute.xlu0 %140
    %142 = vset.pattern.permute.xlu0 4
    %143 = vperm.xlu0 %142, %v52
    %v144 = vpop.permute.xlu0 %143
    %145 = vset.pattern.permute.xlu0 4
    %146 = vperm.xlu0 %145, %v53
    %v147 = vpop.permute.xlu0 %146
    %vm148 = vcmp.eq.s32.totalorder %v55, %v138
    %vm149 = vcmp.eq.s32.totalorder %v55, %v141
    %vm150 = vcmp.eq.s32.totalorder %v55, %v144
    %vm151 = vcmp.eq.s32.totalorder %v55, %v147
    %v152 = vsel %vm148, 1.0, 0.0
    %v153 = vsel %vm149, 1.0, 0.0
    %v154 = vsel %vm150, 1.0, 0.0
    %v155 = vsel %vm151, 1.0, 0.0
    %v156 = vld [vmem:[%s1] sm:$0xff]
    %v157 = vld [vmem:[%s1 + $0x8] sm:$0xff]
    %v158 = vld [vmem:[%s1 + $0x10] sm:$0xf]
    %v159 = vld [vmem:[%s5] sm:$0xff]
    %vm160 = vcmask 64512
    %v162 = vsel %vm160, %v156, 0
    %v165 = vsel %vm160, %v157, 0
    %v168 = vsel %vm160, %v158, 0
    %170 = vmatprep.subr.mxu0 0.0
    %171 = vmatpush1.msra.mxu0 0.0
    %172 = vmatprep.subr.mxu0 0.0
    %173 = vmatpush1.msra.mxu0 0.0
    %174 = vmatprep.subr.mxu0 0.0
    %175 = vmatpush1.msra.mxu0 0.0
    %176 = vmatprep.subr.mxu0 0.0
    %177 = vmatpush1.msra.mxu0 0.0
    %178 = vmatprep.subr.mxu0 0.0
    %179 = vmatpush1.msra.mxu0 0.0
    %180 = vmatprep.subr.mxu0 0.0
    %181 = vmatpush1.msra.mxu0 0.0
    %182 = vmatprep.subr.mxu0 0.0
    %183 = vmatpush1.msra.mxu0 0.0
    %184 = vmatprep.subr.mxu0 0.0
    %185 = vmatpush1.msra.mxu0 0.0
    %186 = vmatprep.subr.mxu0 0.0
    %187 = vmatpush1.msra.mxu0 0.0
    %188 = vmatprep.subr.mxu0 0.0
    %189 = vmatpush1.msra.mxu0 0.0
    %190 = vmatprep.subr.mxu0 0.0
    %191 = vmatpush1.msra.mxu0 0.0
    %192 = vmatprep.subr.mxu0 0.0
    %193 = vmatpush1.msra.mxu0 0.0
    %194 = vmatprep.subr.mxu0 0.0
    %195 = vmatpush1.msra.mxu0 0.0
    %196 = vmatprep.subr.mxu0 0.0
    %197 = vmatpush1.msra.mxu0 0.0
    %198 = vmatprep.subr.mxu0 0.0
    %199 = vmatpush1.msra.mxu0 0.0
    %200 = vmatprep.subr.mxu0 0.0
    %201 = vmatpush1.msra.mxu0 %v159
    %202 = vmatprep.subr.mxu0 0.0
    %203 = vmatpush2.msra.mxu0 0.0
    %204 = vmatprep.subr.mxu0 0.0
    %205 = vmatpush2.msra.mxu0 0.0
    %206 = vmatprep.subr.mxu0 0.0
    %207 = vmatpush2.msra.mxu0 0.0
    %208 = vmatprep.subr.mxu0 0.0
    %209 = vmatpush2.msra.mxu0 0.0
    %210 = vmatprep.subr.mxu0 0.0
    %211 = vmatpush2.msra.mxu0 0.0
    %212 = vmatprep.subr.mxu0 0.0
    %213 = vmatpush2.msra.mxu0 0.0
    %214 = vmatprep.subr.mxu0 0.0
    %215 = vmatpush2.msra.mxu0 0.0
    %216 = vmatprep.subr.mxu0 0.0
    %217 = vmatpush2.msra.mxu0 0.0
    %218 = vmatprep.subr.mxu0 0.0
    %219 = vmatpush2.msra.mxu0 0.0
    %220 = vmatprep.subr.mxu0 0.0
    %221 = vmatpush2.msra.mxu0 0.0
    %222 = vmatprep.subr.mxu0 0.0
    %223 = vmatpush2.msra.mxu0 0.0
    %224 = vmatprep.subr.mxu0 0.0
    %225 = vmatpush2.msra.mxu0 0.0
    %226 = vmatprep.subr.mxu0 0.0
    %227 = vmatpush2.msra.mxu0 0.0
    %228 = vmatprep.subr.mxu0 0.0
    %229 = vmatpush2.msra.mxu0 0.0
    %230 = vmatprep.subr.mxu0 0.0
    %231 = vmatpush2.msra.mxu0 0.0
    %232 = vmatprep.subr.mxu0 0.0
    %233 = vmatpush2.msra.mxu0 0.0
    %234 = vmatprep.mubr.f32.mxu0 0.0
    %235 = vmatmul.mubr.f32.gmra.mxu0 %v162
    %v236 = vpop.f32.mrf.mxu0
    %v237 = vadd.f32 0.0, %v236
    %v238 = vpop.f32.mrf.mxu0
    %239 = vmatprep.mubr.f32.mxu0 0.0
    %240 = vmatmul.mubr.f32.gmra.mxu0 %v165
    %v241 = vpop.f32.mrf.mxu0
    %v242 = vadd.f32 0.0, %v241
    %v243 = vpop.f32.mrf.mxu0
    %244 = vmatprep.mubr.f32.mxu0 0.0
    %245 = vmatmul.mubr.f32.gmra.mxu0 %v168
    %v246 = vpop.f32.mrf.mxu0
    %v247 = vadd.f32 0.0, %v246
    %v248 = vpop.f32.mrf.mxu0
    %249 = vdwg.mxu0
    %vm250 = vcmask 162816
    %v252 = vsel %vm250, %v72, 0
    %v255 = vsel %vm250, %v73, 0
    %v258 = vsel %vm250, %v74, 0
    %v261 = vsel %vm250, %v75, 0
    %vm263 = vcmask 1043456
    %v265 = vsel %vm263, %v247, 0
    %267 = vmatprep.subr.mxu0 0.0
    %268 = vmatpush1.msra.mxu0 0.0
    %269 = vmatprep.subr.mxu0 0.0
    %270 = vmatpush1.msra.mxu0 0.0
    %271 = vmatprep.subr.mxu0 0.0
    %272 = vmatpush1.msra.mxu0 0.0
    %273 = vmatprep.subr.mxu0 0.0
    %274 = vmatpush1.msra.mxu0 0.0
    %275 = vmatprep.subr.mxu0 0.0
    %276 = vmatpush1.msra.mxu0 0.0
    %277 = vmatprep.subr.mxu0 0.0
    %278 = vmatpush1.msra.mxu0 0.0
    %279 = vmatprep.subr.mxu0 0.0
    %280 = vmatpush1.msra.mxu0 0.0
    %281 = vmatprep.subr.mxu0 0.0
    %282 = vmatpush1.msra.mxu0 0.0
    %283 = vmatprep.subr.mxu0 0.0
    %284 = vmatpush1.msra.mxu0 0.0
    %285 = vmatprep.subr.mxu0 0.0
    %286 = vmatpush1.msra.mxu0 0.0
    %287 = vmatprep.subr.mxu0 0.0
    %288 = vmatpush1.msra.mxu0 0.0
    %289 = vmatprep.subr.mxu0 0.0
    %290 = vmatpush1.msra.mxu0 0.0
    %291 = vmatprep.subr.mxu0 0.0
    %292 = vmatpush1.msra.mxu0 0.0
    %293 = vmatprep.subr.mxu0 0.0
    %294 = vmatpush1.msra.mxu0 %v265
    %295 = vmatprep.subr.mxu0 0.0
    %296 = vmatpush1.msra.mxu0 %v242
    %297 = vmatprep.subr.mxu0 0.0
    %298 = vmatpush1.msra.mxu0 %v237
    %299 = vmatprep.subr.mxu0 0.0
    %300 = vmatpush2.msra.mxu0 0.0
    %301 = vmatprep.subr.mxu0 0.0
    %302 = vmatpush2.msra.mxu0 0.0
    %303 = vmatprep.subr.mxu0 0.0
    %304 = vmatpush2.msra.mxu0 0.0
    %305 = vmatprep.subr.mxu0 0.0
    %306 = vmatpush2.msra.mxu0 0.0
    %307 = vmatprep.subr.mxu0 0.0
    %308 = vmatpush2.msra.mxu0 0.0
    %309 = vmatprep.subr.mxu0 0.0
    %310 = vmatpush2.msra.mxu0 0.0
    %311 = vmatprep.subr.mxu0 0.0
    %312 = vmatpush2.msra.mxu0 0.0
    %313 = vmatprep.subr.mxu0 0.0
    %314 = vmatpush2.msra.mxu0 0.0
    %315 = vmatprep.subr.mxu0 0.0
    %316 = vmatpush2.msra.mxu0 0.0
    %317 = vmatprep.subr.mxu0 0.0
    %318 = vmatpush2.msra.mxu0 0.0
    %319 = vmatprep.subr.mxu0 0.0
    %320 = vmatpush2.msra.mxu0 0.0
    %321 = vmatprep.subr.mxu0 0.0
    %322 = vmatpush2.msra.mxu0 0.0
    %323 = vmatprep.subr.mxu0 0.0
    %324 = vmatpush2.msra.mxu0 0.0
    %325 = vmatprep.subr.mxu0 0.0
    %326 = vmatpush2.msra.mxu0 0.0
    %327 = vmatprep.subr.mxu0 0.0
    %328 = vmatpush2.msra.mxu0 0.0
    %329 = vmatprep.subr.mxu0 0.0
    %330 = vmatpush2.msra.mxu0 0.0
    %331 = vmatprep.mubr.f32.mxu0 0.0
    %332 = vmatmul.mubr.f32.gmra.mxu0 %v252
    %v333 = vpop.f32.mrf.mxu0
    %v334 = vadd.f32 0.0, %v333
    %v335 = vpop.f32.mrf.mxu0
    %336 = vmatprep.mubr.f32.mxu0 0.0
    %337 = vmatmul.mubr.f32.gmra.mxu0 %v255
    %v338 = vpop.f32.mrf.mxu0
    %v339 = vadd.f32 0.0, %v338
    %v340 = vpop.f32.mrf.mxu0
    %341 = vmatprep.mubr.f32.mxu0 0.0
    %342 = vmatmul.mubr.f32.gmra.mxu0 %v258
    %v343 = vpop.f32.mrf.mxu0
    %v344 = vadd.f32 0.0, %v343
    %v345 = vpop.f32.mrf.mxu0
    %346 = vmatprep.mubr.f32.mxu0 0.0
    %347 = vmatmul.mubr.f32.gmra.mxu0 %v261
    %v348 = vpop.f32.mrf.mxu0
    %v349 = vadd.f32 0.0, %v348
    %v350 = vpop.f32.mrf.mxu0
    %351 = vdwg.mxu0
    %v353 = vsel %vm250, %v92, 0
    %v356 = vsel %vm250, %v93, 0
    %v359 = vsel %vm250, %v94, 0
    %v362 = vsel %vm250, %v95, 0
    %364 = vmatprep.subr.mxu0 0.0
    %365 = vmatpush1.msra.mxu0 0.0
    %366 = vmatprep.subr.mxu0 0.0
    %367 = vmatpush1.msra.mxu0 0.0
    %368 = vmatprep.subr.mxu0 0.0
    %369 = vmatpush1.msra.mxu0 0.0
    %370 = vmatprep.subr.mxu0 0.0
    %371 = vmatpush1.msra.mxu0 0.0
    %372 = vmatprep.subr.mxu0 0.0
    %373 = vmatpush1.msra.mxu0 0.0
    %374 = vmatprep.subr.mxu0 0.0
    %375 = vmatpush1.msra.mxu0 0.0
    %376 = vmatprep.subr.mxu0 0.0
    %377 = vmatpush1.msra.mxu0 0.0
    %378 = vmatprep.subr.mxu0 0.0
    %379 = vmatpush1.msra.mxu0 0.0
    %380 = vmatprep.subr.mxu0 0.0
    %381 = vmatpush1.msra.mxu0 0.0
    %382 = vmatprep.subr.mxu0 0.0
    %383 = vmatpush1.msra.mxu0 0.0
    %384 = vmatprep.subr.mxu0 0.0
    %385 = vmatpush1.msra.mxu0 0.0
    %386 = vmatprep.subr.mxu0 0.0
    %387 = vmatpush1.msra.mxu0 0.0
    %388 = vmatprep.subr.mxu0 0.0
    %389 = vmatpush1.msra.mxu0 0.0
    %390 = vmatprep.subr.mxu0 0.0
    %391 = vmatpush1.msra.mxu0 %v265
    %392 = vmatprep.subr.mxu0 0.0
    %393 = vmatpush1.msra.mxu0 %v242
    %394 = vmatprep.subr.mxu0 0.0
    %395 = vmatpush1.msra.mxu0 %v237
    %396 = vmatprep.subr.mxu0 0.0
    %397 = vmatpush2.msra.mxu0 0.0
    %398 = vmatprep.subr.mxu0 0.0
    %399 = vmatpush2.msra.mxu0 0.0
    %400 = vmatprep.subr.mxu0 0.0
    %401 = vmatpush2.msra.mxu0 0.0
    %402 = vmatprep.subr.mxu0 0.0
    %403 = vmatpush2.msra.mxu0 0.0
    %404 = vmatprep.subr.mxu0 0.0
    %405 = vmatpush2.msra.mxu0 0.0
    %406 = vmatprep.subr.mxu0 0.0
    %407 = vmatpush2.msra.mxu0 0.0
    %408 = vmatprep.subr.mxu0 0.0
    %409 = vmatpush2.msra.mxu0 0.0
    %410 = vmatprep.subr.mxu0 0.0
    %411 = vmatpush2.msra.mxu0 0.0
    %412 = vmatprep.subr.mxu0 0.0
    %413 = vmatpush2.msra.mxu0 0.0
    %414 = vmatprep.subr.mxu0 0.0
    %415 = vmatpush2.msra.mxu0 0.0
    %416 = vmatprep.subr.mxu0 0.0
    %417 = vmatpush2.msra.mxu0 0.0
    %418 = vmatprep.subr.mxu0 0.0
    %419 = vmatpush2.msra.mxu0 0.0
    %420 = vmatprep.subr.mxu0 0.0
    %421 = vmatpush2.msra.mxu0 0.0
    %422 = vmatprep.subr.mxu0 0.0
    %423 = vmatpush2.msra.mxu0 0.0
    %424 = vmatprep.subr.mxu0 0.0
    %425 = vmatpush2.msra.mxu0 0.0
    %426 = vmatprep.subr.mxu0 0.0
    %427 = vmatpush2.msra.mxu0 0.0
    %428 = vmatprep.mubr.f32.mxu0 0.0
    %429 = vmatmul.mubr.f32.gmra.mxu0 %v353
    %v430 = vpop.f32.mrf.mxu0
    %v431 = vadd.f32 0.0, %v430
    %v432 = vpop.f32.mrf.mxu0
    %433 = vmatprep.mubr.f32.mxu0 0.0
    %434 = vmatmul.mubr.f32.gmra.mxu0 %v356
    %v435 = vpop.f32.mrf.mxu0
    %v436 = vadd.f32 0.0, %v435
    %v437 = vpop.f32.mrf.mxu0
    %438 = vmatprep.mubr.f32.mxu0 0.0
    %439 = vmatmul.mubr.f32.gmra.mxu0 %v359
    %v440 = vpop.f32.mrf.mxu0
    %v441 = vadd.f32 0.0, %v440
    %v442 = vpop.f32.mrf.mxu0
    %443 = vmatprep.mubr.f32.mxu0 0.0
    %444 = vmatmul.mubr.f32.gmra.mxu0 %v362
    %v445 = vpop.f32.mrf.mxu0
    %v446 = vadd.f32 0.0, %v445
    %v447 = vpop.f32.mrf.mxu0
    %448 = vdwg.mxu0
    %453 = vrot.lane.b32.xlu0 %v431, 127
    %v454 = vpop.permute.xlu0 %453
    %455 = vrot.lane.b32.xlu0 %v436, 127
    %v456 = vpop.permute.xlu0 %455
    %457 = vrot.lane.b32.xlu0 %v441, 127
    %v458 = vpop.permute.xlu0 %457
    %459 = vrot.lane.b32.xlu0 %v446, 127
    %v460 = vpop.permute.xlu0 %459
    %v465 = vadd.f32 %v334, %v454
    %v466 = vadd.f32 %v339, %v456
    %v467 = vadd.f32 %v344, %v458
    %v468 = vadd.f32 %v349, %v460
    %vm469 = vcmp.ge.f32.partialorder %v465, 0.0
    %vm470 = vcmp.ge.f32.partialorder %v466, 0.0
    %vm471 = vcmp.ge.f32.partialorder %v467, 0.0
    %vm472 = vcmp.ge.f32.partialorder %v468, 0.0
    %v473 = vmul.f32 %v465, 0.01
    %v474 = vmul.f32 %v466, 0.01
    %v475 = vmul.f32 %v467, 0.01
    %v476 = vmul.f32 %v468, 0.01
    %v477 = vsel %vm469, %v465, %v473
    %v478 = vsel %vm470, %v466, %v474
    %v479 = vsel %vm471, %v467, %v475
    %v480 = vsel %vm472, %v468, %v476
    %482 = vset.pattern.permute.xlu0 0
    %483 = vperm.xlu0 %482, %v477
    %v484 = vpop.permute.xlu0 %483
    %487 = vset.pattern.permute.xlu0 0
    %488 = vperm.xlu0 %487, %v478
    %v489 = vpop.permute.xlu0 %488
    %492 = vset.pattern.permute.xlu0 0
    %493 = vperm.xlu0 %492, %v479
    %v494 = vpop.permute.xlu0 %493
    %497 = vset.pattern.permute.xlu0 0
    %498 = vperm.xlu0 %497, %v480
    %v499 = vpop.permute.xlu0 %498
    %v501 = vsel %vm68, %v484, -1e+30
    %v502 = vsel %vm69, %v489, -1e+30
    %v503 = vsel %vm70, %v494, -1e+30
    %v504 = vsel %vm71, %v499, -1e+30
    %v505 = vsel %vm250, %v501, -inf
    %v506 = vsel %vm250, %v502, -inf
    %v507 = vsel %vm250, %v503, -inf
    %v508 = vsel %vm250, %v504, -inf
    %v509 = vmax.f32 %v505, %v506
    %v510 = vmax.f32 %v507, %v508
    %v511 = vmax.f32 %v509, %v510
    %v512 = vrot.slane %v511, 4
    %v513 = vmax.f32 %v511, %v512
    %v514 = vrot.slane %v513, 2
    %v515 = vmax.f32 %v513, %v514
    %v516 = vrot.slane %v515, 1
    %v517 = vmax.f32 %v515, %v516
    %v518 = vsel %vm68, %v517, 0.0
    %v519 = vsel %vm69, %v517, 0.0
    %v520 = vsel %vm70, %v517, 0.0
    %v521 = vsel %vm71, %v517, 0.0
    %v522 = vsel %vm250, %v518, 0.0
    %523 = vadd.xlane.f32.xlu0 %v522
    %v524 = vpop.xlane.xlu0 %523
    %v525 = vsel %vm250, %v519, 0.0
    %526 = vadd.xlane.f32.xlu0 %v525
    %v527 = vpop.xlane.xlu0 %526
    %v528 = vsel %vm250, %v520, 0.0
    %529 = vadd.xlane.f32.xlu0 %v528
    %v530 = vpop.xlane.xlu0 %529
    %v531 = vsel %vm250, %v521, 0.0
    %532 = vadd.xlane.f32.xlu0 %v531
    %v533 = vpop.xlane.xlu0 %532
    %v534 = vsub.f32 %v477, %v524
    %v535 = vsub.f32 %v478, %v527
    %v536 = vsub.f32 %v479, %v530
    %v537 = vsub.f32 %v480, %v533
    %v538 = vmul.f32 %v534, 1.442695
    %v539 = vpow.pop %v538
    %v540 = vmul.f32 %v535, 1.442695
    %v541 = vpow.pop %v540
    %v542 = vmul.f32 %v536, 1.442695
    %v543 = vpow.pop %v542
    %v544 = vmul.f32 %v537, 1.442695
    %v545 = vpow.pop %v544
    %546 = vxpose.xlu0.b32.start [1/16] %v72, 128
    %547 = vxpose.xlu0.b32.cont [2/16] %v73, 128
    %548 = vxpose.xlu0.b32.cont [3/16] %v74, 128
    %549 = vxpose.xlu0.b32.cont [4/16] %v75, 128
    %550 = vxpose.xlu0.b32.cont [5/16] 0.0, 128
    %551 = vxpose.xlu0.b32.cont [6/16] 0.0, 128
    %552 = vxpose.xlu0.b32.cont [7/16] 0.0, 128
    %553 = vxpose.xlu0.b32.cont [8/16] 0.0, 128
    %554 = vxpose.xlu0.b32.cont [9/16] 0.0, 128
    %555 = vxpose.xlu0.b32.cont [10/16] 0.0, 128
    %556 = vxpose.xlu0.b32.cont [11/16] 0.0, 128
    %557 = vxpose.xlu0.b32.cont [12/16] 0.0, 128
    %558 = vxpose.xlu0.b32.cont [13/16] 0.0, 128
    %559 = vxpose.xlu0.b32.cont [14/16] 0.0, 128
    %560 = vxpose.xlu0.b32.cont [15/16] 0.0, 128
    %561 = vxpose.xlu0.b32.end [16/16] 0.0, 128
    %v562 = vpop.trf.xlu0
    %v563 = vpop.trf.xlu0
    %v564 = vpop.trf.xlu0
    %v565 = vpop.trf.xlu0
    %v566 = vpop.trf.xlu0
    %v567 = vpop.trf.xlu0
    %v568 = vpop.trf.xlu0
    %v569 = vpop.trf.xlu0
    %v570 = vpop.trf.xlu0
    %v571 = vpop.trf.xlu0
    %v572 = vpop.trf.xlu0
    %v573 = vpop.trf.xlu0
    %v574 = vpop.trf.xlu0
    %v575 = vpop.trf.xlu0
    %v576 = vpop.trf.xlu0
    %v577 = vpop.trf.xlu0
    %vm578 = vcmask 261120
    %v580 = vsel %vm578, %v562, 0
    %v583 = vsel %vm578, %v563, 0
    %v586 = vsel %vm578, %v564, 0
    %588 = vmatprep.subr.mxu0 0.0
    %589 = vmatpush1.msra.mxu0 0.0
    %590 = vmatprep.subr.mxu0 0.0
    %591 = vmatpush1.msra.mxu0 0.0
    %592 = vmatprep.subr.mxu0 0.0
    %593 = vmatpush1.msra.mxu0 0.0
    %594 = vmatprep.subr.mxu0 0.0
    %595 = vmatpush1.msra.mxu0 0.0
    %596 = vmatprep.subr.mxu0 0.0
    %597 = vmatpush1.msra.mxu0 0.0
    %598 = vmatprep.subr.mxu0 0.0
    %599 = vmatpush1.msra.mxu0 0.0
    %600 = vmatprep.subr.mxu0 0.0
    %601 = vmatpush1.msra.mxu0 0.0
    %602 = vmatprep.subr.mxu0 0.0
    %603 = vmatpush1.msra.mxu0 0.0
    %604 = vmatprep.subr.mxu0 0.0
    %605 = vmatpush1.msra.mxu0 0.0
    %606 = vmatprep.subr.mxu0 0.0
    %607 = vmatpush1.msra.mxu0 0.0
    %608 = vmatprep.subr.mxu0 0.0
    %609 = vmatpush1.msra.mxu0 0.0
    %610 = vmatprep.subr.mxu0 0.0
    %611 = vmatpush1.msra.mxu0 0.0
    %612 = vmatprep.subr.mxu0 0.0
    %613 = vmatpush1.msra.mxu0 %v545
    %614 = vmatprep.subr.mxu0 0.0
    %615 = vmatpush1.msra.mxu0 %v543
    %616 = vmatprep.subr.mxu0 0.0
    %617 = vmatpush1.msra.mxu0 %v541
    %618 = vmatprep.subr.mxu0 0.0
    %619 = vmatpush1.msra.mxu0 %v539
    %620 = vmatprep.subr.mxu0 0.0
    %621 = vmatpush2.msra.mxu0 0.0
    %622 = vmatprep.subr.mxu0 0.0
    %623 = vmatpush2.msra.mxu0 0.0
    %624 = vmatprep.subr.mxu0 0.0
    %625 = vmatpush2.msra.mxu0 0.0
    %626 = vmatprep.subr.mxu0 0.0
    %627 = vmatpush2.msra.mxu0 0.0
    %628 = vmatprep.subr.mxu0 0.0
    %629 = vmatpush2.msra.mxu0 0.0
    %630 = vmatprep.subr.mxu0 0.0
    %631 = vmatpush2.msra.mxu0 0.0
    %632 = vmatprep.subr.mxu0 0.0
    %633 = vmatpush2.msra.mxu0 0.0
    %634 = vmatprep.subr.mxu0 0.0
    %635 = vmatpush2.msra.mxu0 0.0
    %636 = vmatprep.subr.mxu0 0.0
    %637 = vmatpush2.msra.mxu0 0.0
    %638 = vmatprep.subr.mxu0 0.0
    %639 = vmatpush2.msra.mxu0 0.0
    %640 = vmatprep.subr.mxu0 0.0
    %641 = vmatpush2.msra.mxu0 0.0
    %642 = vmatprep.subr.mxu0 0.0
    %643 = vmatpush2.msra.mxu0 0.0
    %644 = vmatprep.subr.mxu0 0.0
    %645 = vmatpush2.msra.mxu0 0.0
    %646 = vmatprep.subr.mxu0 0.0
    %647 = vmatpush2.msra.mxu0 0.0
    %648 = vmatprep.subr.mxu0 0.0
    %649 = vmatpush2.msra.mxu0 0.0
    %650 = vmatprep.subr.mxu0 0.0
    %651 = vmatpush2.msra.mxu0 0.0
    %652 = vmatprep.mubr.f32.mxu0 0.0
    %653 = vmatmul.mubr.f32.gmra.mxu0 %v580
    %v654 = vpop.f32.mrf.mxu0
    %v655 = vadd.f32 0.0, %v654
    %v656 = vpop.f32.mrf.mxu0
    %657 = vmatprep.mubr.f32.mxu0 0.0
    %658 = vmatmul.mubr.f32.gmra.mxu0 %v583
    %v659 = vpop.f32.mrf.mxu0
    %v660 = vadd.f32 0.0, %v659
    %v661 = vpop.f32.mrf.mxu0
    %662 = vmatprep.mubr.f32.mxu0 0.0
    %663 = vmatmul.mubr.f32.gmra.mxu0 %v586
    %v664 = vpop.f32.mrf.mxu0
    %v665 = vadd.f32 0.0, %v664
    %v666 = vpop.f32.mrf.mxu0
    %667 = vdwg.mxu0
    %v669 = vsel %vm263, %v665, 0
    %671 = vmatprep.subr.mxu0 0.0
    %672 = vmatpush1.msra.mxu0 0.0
    %673 = vmatprep.subr.mxu0 0.0
    %674 = vmatpush1.msra.mxu0 0.0
    %675 = vmatprep.subr.mxu0 0.0
    %676 = vmatpush1.msra.mxu0 0.0
    %677 = vmatprep.subr.mxu0 0.0
    %678 = vmatpush1.msra.mxu0 0.0
    %679 = vmatprep.subr.mxu0 0.0
    %680 = vmatpush1.msra.mxu0 0.0
    %681 = vmatprep.subr.mxu0 0.0
    %682 = vmatpush1.msra.mxu0 0.0
    %683 = vmatprep.subr.mxu0 0.0
    %684 = vmatpush1.msra.mxu0 0.0
    %685 = vmatprep.subr.mxu0 0.0
    %686 = vmatpush1.msra.mxu0 0.0
    %687 = vmatprep.subr.mxu0 0.0
    %688 = vmatpush1.msra.mxu0 0.0
    %689 = vmatprep.subr.mxu0 0.0
    %690 = vmatpush1.msra.mxu0 0.0
    %691 = vmatprep.subr.mxu0 0.0
    %692 = vmatpush1.msra.mxu0 0.0
    %693 = vmatprep.subr.mxu0 0.0
    %694 = vmatpush1.msra.mxu0 0.0
    %695 = vmatprep.subr.mxu0 0.0
    %696 = vmatpush1.msra.mxu0 0.0
    %697 = vmatprep.subr.mxu0 0.0
    %698 = vmatpush1.msra.mxu0 %v669
    %699 = vmatprep.subr.mxu0 0.0
    %700 = vmatpush1.msra.mxu0 %v660
    %701 = vmatprep.subr.mxu0 0.0
    %702 = vmatpush1.msra.mxu0 %v655
    %703 = vmatprep.subr.mxu0 0.0
    %704 = vmatpush2.msra.mxu0 0.0
    %705 = vmatprep.subr.mxu0 0.0
    %706 = vmatpush2.msra.mxu0 0.0
    %707 = vmatprep.subr.mxu0 0.0
    %708 = vmatpush2.msra.mxu0 0.0
    %709 = vmatprep.subr.mxu0 0.0
    %710 = vmatpush2.msra.mxu0 0.0
    %711 = vmatprep.subr.mxu0 0.0
    %712 = vmatpush2.msra.mxu0 0.0
    %713 = vmatprep.subr.mxu0 0.0
    %714 = vmatpush2.msra.mxu0 0.0
    %715 = vmatprep.subr.mxu0 0.0
    %716 = vmatpush2.msra.mxu0 0.0
    %717 = vmatprep.subr.mxu0 0.0
    %718 = vmatpush2.msra.mxu0 0.0
    %719 = vmatprep.subr.mxu0 0.0
    %720 = vmatpush2.msra.mxu0 0.0
    %721 = vmatprep.subr.mxu0 0.0
    %722 = vmatpush2.msra.mxu0 0.0
    %723 = vmatprep.subr.mxu0 0.0
    %724 = vmatpush2.msra.mxu0 0.0
    %725 = vmatprep.subr.mxu0 0.0
    %726 = vmatpush2.msra.mxu0 0.0
    %727 = vmatprep.subr.mxu0 0.0
    %728 = vmatpush2.msra.mxu0 0.0
    %729 = vmatprep.subr.mxu0 0.0
    %730 = vmatpush2.msra.mxu0 0.0
    %731 = vmatprep.subr.mxu0 0.0
    %732 = vmatpush2.msra.mxu0 0.0
    %733 = vmatprep.subr.mxu0 0.0
    %734 = vmatpush2.msra.mxu0 0.0
    %735 = vmatprep.mubr.f32.mxu0 0.0
    %736 = vmatmul.mubr.f32.gmra.mxu0 %v252
    %v737 = vpop.f32.mrf.mxu0
    %v738 = vadd.f32 0.0, %v737
    %v739 = vpop.f32.mrf.mxu0
    %740 = vmatprep.mubr.f32.mxu0 0.0
    %741 = vmatmul.mubr.f32.gmra.mxu0 %v255
    %v742 = vpop.f32.mrf.mxu0
    %v743 = vadd.f32 0.0, %v742
    %v744 = vpop.f32.mrf.mxu0
    %745 = vmatprep.mubr.f32.mxu0 0.0
    %746 = vmatmul.mubr.f32.gmra.mxu0 %v258
    %v747 = vpop.f32.mrf.mxu0
    %v748 = vadd.f32 0.0, %v747
    %v749 = vpop.f32.mrf.mxu0
    %750 = vmatprep.mubr.f32.mxu0 0.0
    %751 = vmatmul.mubr.f32.gmra.mxu0 %v261
    %v752 = vpop.f32.mrf.mxu0
    %v753 = vadd.f32 0.0, %v752
    %v754 = vpop.f32.mrf.mxu0
    %755 = vdwg.mxu0
    %v756 = vrcp.pop %v738
    %v757 = vrcp.pop %v743
    %v758 = vrcp.pop %v748
    %v759 = vrcp.pop %v753
    %v760 = vmul.f32 %v539, %v756
    %v761 = vmul.f32 %v541, %v757
    %v762 = vmul.f32 %v543, %v758
    %v763 = vmul.f32 %v545, %v759
    %v764 = vld [vmem:[%s2] sm:$0xff]
    %v765 = vld [vmem:[%s2 + $0x8] sm:$0xff]
    %v766 = vld [vmem:[%s2 + $0x10] sm:$0xff]
    %v767 = vld [vmem:[%s2 + $0x18] sm:$0xff]
    %v768 = vld [vmem:[%s6] sm:$0xff]
    %v769 = vld [vmem:[%s6 + $0x8] sm:$0xff]
    %v770 = vld [vmem:[%s7] sm:$0x1]
    %v771 = vlaneseq
    %v772 = vshrl.u32 %v771, 7
    %v773 = vsub.s32 0, %v772
    %v774 = vrot.slane %v770, %v773
    %vm775 = vcmask 130048
    %v777 = vsel %vm775, %v764, 0
    %v780 = vsel %vm775, %v765, 0
    %v783 = vsel %vm775, %v766, 0
    %v786 = vsel %vm775, %v767, 0
    %788 = vmatprep.subr.mxu0 0.0
    %789 = vmatpush1.msra.mxu0 0.0
    %790 = vmatprep.subr.mxu0 0.0
    %791 = vmatpush1.msra.mxu0 0.0
    %792 = vmatprep.subr.mxu0 0.0
    %793 = vmatpush1.msra.mxu0 0.0
    %794 = vmatprep.subr.mxu0 0.0
    %795 = vmatpush1.msra.mxu0 0.0
    %796 = vmatprep.subr.mxu0 0.0
    %797 = vmatpush1.msra.mxu0 0.0
    %798 = vmatprep.subr.mxu0 0.0
    %799 = vmatpush1.msra.mxu0 0.0
    %800 = vmatprep.subr.mxu0 0.0
    %801 = vmatpush1.msra.mxu0 0.0
    %802 = vmatprep.subr.mxu0 0.0
    %803 = vmatpush1.msra.mxu0 0.0
    %804 = vmatprep.subr.mxu0 0.0
    %805 = vmatpush1.msra.mxu0 0.0
    %806 = vmatprep.subr.mxu0 0.0
    %807 = vmatpush1.msra.mxu0 0.0
    %808 = vmatprep.subr.mxu0 0.0
    %809 = vmatpush1.msra.mxu0 0.0
    %810 = vmatprep.subr.mxu0 0.0
    %811 = vmatpush1.msra.mxu0 0.0
    %812 = vmatprep.subr.mxu0 0.0
    %813 = vmatpush1.msra.mxu0 0.0
    %814 = vmatprep.subr.mxu0 0.0
    %815 = vmatpush1.msra.mxu0 0.0
    %816 = vmatprep.subr.mxu0 0.0
    %817 = vmatpush1.msra.mxu0 %v769
    %818 = vmatprep.subr.mxu0 0.0
    %819 = vmatpush1.msra.mxu0 %v768
    %820 = vmatprep.subr.mxu0 0.0
    %821 = vmatpush2.msra.mxu0 0.0
    %822 = vmatprep.subr.mxu0 0.0
    %823 = vmatpush2.msra.mxu0 0.0
    %824 = vmatprep.subr.mxu0 0.0
    %825 = vmatpush2.msra.mxu0 0.0
    %826 = vmatprep.subr.mxu0 0.0
    %827 = vmatpush2.msra.mxu0 0.0
    %828 = vmatprep.subr.mxu0 0.0
    %829 = vmatpush2.msra.mxu0 0.0
    %830 = vmatprep.subr.mxu0 0.0
    %831 = vmatpush2.msra.mxu0 0.0
    %832 = vmatprep.subr.mxu0 0.0
    %833 = vmatpush2.msra.mxu0 0.0
    %834 = vmatprep.subr.mxu0 0.0
    %835 = vmatpush2.msra.mxu0 0.0
    %836 = vmatprep.subr.mxu0 0.0
    %837 = vmatpush2.msra.mxu0 0.0
    %838 = vmatprep.subr.mxu0 0.0
    %839 = vmatpush2.msra.mxu0 0.0
    %840 = vmatprep.subr.mxu0 0.0
    %841 = vmatpush2.msra.mxu0 0.0
    %842 = vmatprep.subr.mxu0 0.0
    %843 = vmatpush2.msra.mxu0 0.0
    %844 = vmatprep.subr.mxu0 0.0
    %845 = vmatpush2.msra.mxu0 0.0
    %846 = vmatprep.subr.mxu0 0.0
    %847 = vmatpush2.msra.mxu0 0.0
    %848 = vmatprep.subr.mxu0 0.0
    %849 = vmatpush2.msra.mxu0 0.0
    %850 = vmatprep.subr.mxu0 0.0
    %851 = vmatpush2.msra.mxu0 0.0
    %852 = vmatprep.mubr.f32.mxu0 0.0
    %853 = vmatmul.mubr.f32.gmra.mxu0 %v777
    %v854 = vpop.f32.mrf.mxu0
    %v855 = vadd.f32 %v774, %v854
    %v856 = vpop.f32.mrf.mxu0
    %857 = vmatprep.mubr.f32.mxu0 0.0
    %858 = vmatmul.mubr.f32.gmra.mxu0 %v780
    %v859 = vpop.f32.mrf.mxu0
    %v860 = vadd.f32 %v774, %v859
    %v861 = vpop.f32.mrf.mxu0
    %862 = vmatprep.mubr.f32.mxu0 0.0
    %863 = vmatmul.mubr.f32.gmra.mxu0 %v783
    %v864 = vpop.f32.mrf.mxu0
    %v865 = vadd.f32 %v774, %v864
    %v866 = vpop.f32.mrf.mxu0
    %867 = vmatprep.mubr.f32.mxu0 0.0
    %868 = vmatmul.mubr.f32.gmra.mxu0 %v786
    %v869 = vpop.f32.mrf.mxu0
    %v870 = vadd.f32 %v774, %v869
    %v871 = vpop.f32.mrf.mxu0
    %872 = vdwg.mxu0
    %vm873 = vcmp.lt.s32.totalorder %v55, 32
    %v874 = vlaneseq
    %v875 = vshrl.u32 %v874, 7
    %v876 = vadd.s32 %v875, 8
    %v877 = vadd.s32 %v875, 16
    %v878 = vadd.s32 %v875, 24
    %v879 = vadd.s32 %v875, 32
    %v880 = vadd.s32 %v875, 40
    %v881 = vadd.s32 %v875, 48
    %v882 = vadd.s32 %v875, 56
    %vm883 = vcmp.lt.s32.totalorder %v875, 32
    %vm884 = vcmp.lt.s32.totalorder %v876, 32
    %vm885 = vcmp.lt.s32.totalorder %v877, 32
    %vm886 = vcmp.lt.s32.totalorder %v878, 32
    %vm887 = vcmp.lt.s32.totalorder %v879, 32
    %vm888 = vcmp.lt.s32.totalorder %v880, 32
    %vm889 = vcmp.lt.s32.totalorder %v881, 32
    %vm890 = vcmp.lt.s32.totalorder %v882, 32
    %vm891 = vcmp.eq.s32.totalorder %v55, 0
    %vm892 = vmxor %vm883, %vm891
    %vm893 = vmxor %vm884, %vm891
    %vm894 = vmxor %vm885, %vm891
    %vm895 = vmxor %vm886, %vm891
    %vm896 = vmxor %vm887, %vm891
    %vm897 = vmxor %vm888, %vm891
    %vm898 = vmxor %vm889, %vm891
    %vm899 = vmxor %vm890, %vm891
    %vm900 = vmxor %vm892, 1
    %vm901 = vmxor %vm893, 1
    %vm902 = vmxor %vm894, 1
    %vm903 = vmxor %vm895, 1
    %vm904 = vmxor %vm896, 1
    %vm905 = vmxor %vm897, 1
    %vm906 = vmxor %vm898, 1
    %vm907 = vmxor %vm899, 1
    %v908 = vsel %vm900, 1.0, 0.0
    %v909 = vsel %vm901, 1.0, 0.0
    %v910 = vsel %vm902, 1.0, 0.0
    %v911 = vsel %vm903, 1.0, 0.0
    %v912 = vsel %vm904, 1.0, 0.0
    %v913 = vsel %vm905, 1.0, 0.0
    %v914 = vsel %vm906, 1.0, 0.0
    %v915 = vsel %vm907, 1.0, 0.0
    %vm916 = vcmask 523264
    %v918 = vsel %vm916, %v855, 0
    %v921 = vsel %vm916, %v860, 0
    %v924 = vsel %vm916, %v865, 0
    %v927 = vsel %vm916, %v870, 0
    %929 = vmatprep.subr.mxu0 0.0
    %930 = vmatpush1.msra.mxu0 0.0
    %931 = vmatprep.subr.mxu0 0.0
    %932 = vmatpush1.msra.mxu0 0.0
    %933 = vmatprep.subr.mxu0 0.0
    %934 = vmatpush1.msra.mxu0 0.0
    %935 = vmatprep.subr.mxu0 0.0
    %936 = vmatpush1.msra.mxu0 0.0
    %937 = vmatprep.subr.mxu0 0.0
    %938 = vmatpush1.msra.mxu0 0.0
    %939 = vmatprep.subr.mxu0 0.0
    %940 = vmatpush1.msra.mxu0 0.0
    %941 = vmatprep.subr.mxu0 0.0
    %942 = vmatpush1.msra.mxu0 0.0
    %943 = vmatprep.subr.mxu0 0.0
    %944 = vmatpush1.msra.mxu0 0.0
    %945 = vmatprep.subr.mxu0 0.0
    %946 = vmatpush1.msra.mxu0 %v915
    %947 = vmatprep.subr.mxu0 0.0
    %948 = vmatpush1.msra.mxu0 %v914
    %949 = vmatprep.subr.mxu0 0.0
    %950 = vmatpush1.msra.mxu0 %v913
    %951 = vmatprep.subr.mxu0 0.0
    %952 = vmatpush1.msra.mxu0 %v912
    %953 = vmatprep.subr.mxu0 0.0
    %954 = vmatpush1.msra.mxu0 %v911
    %955 = vmatprep.subr.mxu0 0.0
    %956 = vmatpush1.msra.mxu0 %v910
    %957 = vmatprep.subr.mxu0 0.0
    %958 = vmatpush1.msra.mxu0 %v909
    %959 = vmatprep.subr.mxu0 0.0
    %960 = vmatpush1.msra.mxu0 %v908
    %961 = vmatprep.subr.mxu0 0.0
    %962 = vmatpush2.msra.mxu0 0.0
    %963 = vmatprep.subr.mxu0 0.0
    %964 = vmatpush2.msra.mxu0 0.0
    %965 = vmatprep.subr.mxu0 0.0
    %966 = vmatpush2.msra.mxu0 0.0
    %967 = vmatprep.subr.mxu0 0.0
    %968 = vmatpush2.msra.mxu0 0.0
    %969 = vmatprep.subr.mxu0 0.0
    %970 = vmatpush2.msra.mxu0 0.0
    %971 = vmatprep.subr.mxu0 0.0
    %972 = vmatpush2.msra.mxu0 0.0
    %973 = vmatprep.subr.mxu0 0.0
    %974 = vmatpush2.msra.mxu0 0.0
    %975 = vmatprep.subr.mxu0 0.0
    %976 = vmatpush2.msra.mxu0 0.0
    %977 = vmatprep.subr.mxu0 0.0
    %978 = vmatpush2.msra.mxu0 0.0
    %979 = vmatprep.subr.mxu0 0.0
    %980 = vmatpush2.msra.mxu0 0.0
    %981 = vmatprep.subr.mxu0 0.0
    %982 = vmatpush2.msra.mxu0 0.0
    %983 = vmatprep.subr.mxu0 0.0
    %984 = vmatpush2.msra.mxu0 0.0
    %985 = vmatprep.subr.mxu0 0.0
    %986 = vmatpush2.msra.mxu0 0.0
    %987 = vmatprep.subr.mxu0 0.0
    %988 = vmatpush2.msra.mxu0 0.0
    %989 = vmatprep.subr.mxu0 0.0
    %990 = vmatpush2.msra.mxu0 0.0
    %991 = vmatprep.subr.mxu0 0.0
    %992 = vmatpush2.msra.mxu0 0.0
    %993 = vmatprep.mubr.f32.mxu0 0.0
    %994 = vmatmul.mubr.f32.gmra.mxu0 %v918
    %v995 = vpop.f32.mrf.mxu0
    %v996 = vadd.f32 0.0, %v995
    %v997 = vpop.f32.mrf.mxu0
    %998 = vmatprep.mubr.f32.mxu0 0.0
    %999 = vmatmul.mubr.f32.gmra.mxu0 %v921
    %v1000 = vpop.f32.mrf.mxu0
    %v1001 = vadd.f32 0.0, %v1000
    %v1002 = vpop.f32.mrf.mxu0
    %1003 = vmatprep.mubr.f32.mxu0 0.0
    %1004 = vmatmul.mubr.f32.gmra.mxu0 %v924
    %v1005 = vpop.f32.mrf.mxu0
    %v1006 = vadd.f32 0.0, %v1005
    %v1007 = vpop.f32.mrf.mxu0
    %1008 = vmatprep.mubr.f32.mxu0 0.0
    %1009 = vmatmul.mubr.f32.gmra.mxu0 %v927
    %v1010 = vpop.f32.mrf.mxu0
    %v1011 = vadd.f32 0.0, %v1010
    %v1012 = vpop.f32.mrf.mxu0
    %1013 = vdwg.mxu0
    %v1014 = vmul.f32 %v996, 0.03125
    %v1015 = vmul.f32 %v1001, 0.03125
    %v1016 = vmul.f32 %v1006, 0.03125
    %v1017 = vmul.f32 %v1011, 0.03125
    %1019 = vset.pattern.permute.xlu0 0
    %1020 = vperm.xlu0 %1019, %v1014
    %v1021 = vpop.permute.xlu0 %1020
    %1024 = vset.pattern.permute.xlu0 0
    %1025 = vperm.xlu0 %1024, %v1015
    %v1026 = vpop.permute.xlu0 %1025
    %1029 = vset.pattern.permute.xlu0 0
    %1030 = vperm.xlu0 %1029, %v1016
    %v1031 = vpop.permute.xlu0 %1030
    %1034 = vset.pattern.permute.xlu0 0
    %1035 = vperm.xlu0 %1034, %v1017
    %v1036 = vpop.permute.xlu0 %1035
    %1038 = vset.pattern.permute.xlu0 1
    %1039 = vperm.xlu0 %1038, %v1014
    %v1040 = vpop.permute.xlu0 %1039
    %1042 = vset.pattern.permute.xlu0 1
    %1043 = vperm.xlu0 %1042, %v1015
    %v1044 = vpop.permute.xlu0 %1043
    %1046 = vset.pattern.permute.xlu0 1
    %1047 = vperm.xlu0 %1046, %v1016
    %v1048 = vpop.permute.xlu0 %1047
    %1050 = vset.pattern.permute.xlu0 1
    %1051 = vperm.xlu0 %1050, %v1017
    %v1052 = vpop.permute.xlu0 %1051
    %v1054 = vsel %vm873, %v1021, %v1040
    %v1055 = vsel %vm873, %v1026, %v1044
    %v1056 = vsel %vm873, %v1031, %v1048
    %v1057 = vsel %vm873, %v1036, %v1052
    %v1058 = vsub.f32 %v855, %v1054
    %v1059 = vsub.f32 %v860, %v1055
    %v1060 = vsub.f32 %v865, %v1056
    %v1061 = vsub.f32 %v870, %v1057
    %v1062 = vmul.f32 %v1058, %v1058
    %v1063 = vmul.f32 %v1059, %v1059
    %v1064 = vmul.f32 %v1060, %v1060
    %v1065 = vmul.f32 %v1061, %v1061
    %v1067 = vsel %vm916, %v1062, 0
    %v1070 = vsel %vm916, %v1063, 0
    %v1073 = vsel %vm916, %v1064, 0
    %v1076 = vsel %vm916, %v1065, 0
    %1078 = vmatprep.subr.mxu0 0.0
    %1079 = vmatpush1.msra.mxu0 0.0
    %1080 = vmatprep.subr.mxu0 0.0
    %1081 = vmatpush1.msra.mxu0 0.0
    %1082 = vmatprep.subr.mxu0 0.0
    %1083 = vmatpush1.msra.mxu0 0.0
    %1084 = vmatprep.subr.mxu0 0.0
    %1085 = vmatpush1.msra.mxu0 0.0
    %1086 = vmatprep.subr.mxu0 0.0
    %1087 = vmatpush1.msra.mxu0 0.0
    %1088 = vmatprep.subr.mxu0 0.0
    %1089 = vmatpush1.msra.mxu0 0.0
    %1090 = vmatprep.subr.mxu0 0.0
    %1091 = vmatpush1.msra.mxu0 0.0
    %1092 = vmatprep.subr.mxu0 0.0
    %1093 = vmatpush1.msra.mxu0 0.0
    %1094 = vmatprep.subr.mxu0 0.0
    %1095 = vmatpush1.msra.mxu0 %v915
    %1096 = vmatprep.subr.mxu0 0.0
    %1097 = vmatpush1.msra.mxu0 %v914
    %1098 = vmatprep.subr.mxu0 0.0
    %1099 = vmatpush1.msra.mxu0 %v913
    %1100 = vmatprep.subr.mxu0 0.0
    %1101 = vmatpush1.msra.mxu0 %v912
    %1102 = vmatprep.subr.mxu0 0.0
    %1103 = vmatpush1.msra.mxu0 %v911
    %1104 = vmatprep.subr.mxu0 0.0
    %1105 = vmatpush1.msra.mxu0 %v910
    %1106 = vmatprep.subr.mxu0 0.0
    %1107 = vmatpush1.msra.mxu0 %v909
    %1108 = vmatprep.subr.mxu0 0.0
    %1109 = vmatpush1.msra.mxu0 %v908
    %1110 = vmatprep.subr.mxu0 0.0
    %1111 = vmatpush2.msra.mxu0 0.0
    %1112 = vmatprep.subr.mxu0 0.0
    %1113 = vmatpush2.msra.mxu0 0.0
    %1114 = vmatprep.subr.mxu0 0.0
    %1115 = vmatpush2.msra.mxu0 0.0
    %1116 = vmatprep.subr.mxu0 0.0
    %1117 = vmatpush2.msra.mxu0 0.0
    %1118 = vmatprep.subr.mxu0 0.0
    %1119 = vmatpush2.msra.mxu0 0.0
    %1120 = vmatprep.subr.mxu0 0.0
    %1121 = vmatpush2.msra.mxu0 0.0
    %1122 = vmatprep.subr.mxu0 0.0
    %1123 = vmatpush2.msra.mxu0 0.0
    %1124 = vmatprep.subr.mxu0 0.0
    %1125 = vmatpush2.msra.mxu0 0.0
    %1126 = vmatprep.subr.mxu0 0.0
    %1127 = vmatpush2.msra.mxu0 0.0
    %1128 = vmatprep.subr.mxu0 0.0
    %1129 = vmatpush2.msra.mxu0 0.0
    %1130 = vmatprep.subr.mxu0 0.0
    %1131 = vmatpush2.msra.mxu0 0.0
    %1132 = vmatprep.subr.mxu0 0.0
    %1133 = vmatpush2.msra.mxu0 0.0
    %1134 = vmatprep.subr.mxu0 0.0
    %1135 = vmatpush2.msra.mxu0 0.0
    %1136 = vmatprep.subr.mxu0 0.0
    %1137 = vmatpush2.msra.mxu0 0.0
    %1138 = vmatprep.subr.mxu0 0.0
    %1139 = vmatpush2.msra.mxu0 0.0
    %1140 = vmatprep.subr.mxu0 0.0
    %1141 = vmatpush2.msra.mxu0 0.0
    %1142 = vmatprep.mubr.f32.mxu0 0.0
    %1143 = vmatmul.mubr.f32.gmra.mxu0 %v1067
    %v1144 = vpop.f32.mrf.mxu0
    %v1145 = vadd.f32 0.0, %v1144
    %v1146 = vpop.f32.mrf.mxu0
    %1147 = vmatprep.mubr.f32.mxu0 0.0
    %1148 = vmatmul.mubr.f32.gmra.mxu0 %v1070
    %v1149 = vpop.f32.mrf.mxu0
    %v1150 = vadd.f32 0.0, %v1149
    %v1151 = vpop.f32.mrf.mxu0
    %1152 = vmatprep.mubr.f32.mxu0 0.0
    %1153 = vmatmul.mubr.f32.gmra.mxu0 %v1073
    %v1154 = vpop.f32.mrf.mxu0
    %v1155 = vadd.f32 0.0, %v1154
    %v1156 = vpop.f32.mrf.mxu0
    %1157 = vmatprep.mubr.f32.mxu0 0.0
    %1158 = vmatmul.mubr.f32.gmra.mxu0 %v1076
    %v1159 = vpop.f32.mrf.mxu0
    %v1160 = vadd.f32 0.0, %v1159
    %v1161 = vpop.f32.mrf.mxu0
    %1162 = vdwg.mxu0
    %v1163 = vmul.f32 %v1145, 0.03125
    %v1164 = vmul.f32 %v1150, 0.03125
    %v1165 = vmul.f32 %v1155, 0.03125
    %v1166 = vmul.f32 %v1160, 0.03125
    %1168 = vset.pattern.permute.xlu0 0
    %1169 = vperm.xlu0 %1168, %v1163
    %v1170 = vpop.permute.xlu0 %1169
    %1173 = vset.pattern.permute.xlu0 0
    %1174 = vperm.xlu0 %1173, %v1164
    %v1175 = vpop.permute.xlu0 %1174
    %1178 = vset.pattern.permute.xlu0 0
    %1179 = vperm.xlu0 %1178, %v1165
    %v1180 = vpop.permute.xlu0 %1179
    %1183 = vset.pattern.permute.xlu0 0
    %1184 = vperm.xlu0 %1183, %v1166
    %v1185 = vpop.permute.xlu0 %1184
    %1187 = vset.pattern.permute.xlu0 1
    %1188 = vperm.xlu0 %1187, %v1163
    %v1189 = vpop.permute.xlu0 %1188
    %1191 = vset.pattern.permute.xlu0 1
    %1192 = vperm.xlu0 %1191, %v1164
    %v1193 = vpop.permute.xlu0 %1192
    %1195 = vset.pattern.permute.xlu0 1
    %1196 = vperm.xlu0 %1195, %v1165
    %v1197 = vpop.permute.xlu0 %1196
    %1199 = vset.pattern.permute.xlu0 1
    %1200 = vperm.xlu0 %1199, %v1166
    %v1201 = vpop.permute.xlu0 %1200
    %v1203 = vsel %vm873, %v1170, %v1189
    %v1204 = vsel %vm873, %v1175, %v1193
    %v1205 = vsel %vm873, %v1180, %v1197
    %v1206 = vsel %vm873, %v1185, %v1201
    %v1207 = vadd.f32 %v1203, 1e-05
    %v1208 = vadd.f32 %v1204, 1e-05
    %v1209 = vadd.f32 %v1205, 1e-05
    %v1210 = vadd.f32 %v1206, 1e-05
    %v1211 = vrsqrt.pop %v1207
    %v1212 = vrsqrt.pop %v1208
    %v1213 = vrsqrt.pop %v1209
    %v1214 = vrsqrt.pop %v1210
    %v1215 = vmul.f32 %v1058, %v1211
    %v1216 = vmul.f32 %v1059, %v1212
    %v1217 = vmul.f32 %v1060, %v1213
    %v1218 = vmul.f32 %v1061, %v1214
    %v1219 = vld [vmem:[%s7 + $0x1] sm:$0x1]
    %v1220 = vlaneseq
    %v1221 = vshrl.u32 %v1220, 7
    %v1222 = vsub.s32 0, %v1221
    %v1223 = vrot.slane %v1219, %v1222
    %v1224 = vmul.f32 %v1215, %v1223
    %v1225 = vmul.f32 %v1216, %v1223
    %v1226 = vmul.f32 %v1217, %v1223
    %v1227 = vmul.f32 %v1218, %v1223
    %v1228 = vld [vmem:[%s7 + $0x2] sm:$0x1]
    %v1229 = vlaneseq
    %v1230 = vshrl.u32 %v1229, 7
    %v1231 = vsub.s32 0, %v1230
    %v1232 = vrot.slane %v1228, %v1231
    %v1233 = vadd.f32 %v1224, %v1232
    %v1234 = vadd.f32 %v1225, %v1232
    %v1235 = vadd.f32 %v1226, %v1232
    %v1236 = vadd.f32 %v1227, %v1232
    %v1237 = vmax.f32 %v1233, 0.0
    %v1238 = vmax.f32 %v1234, 0.0
    %v1239 = vmax.f32 %v1235, 0.0
    %v1240 = vmax.f32 %v1236, 0.0
    %v1241 = vld [vmem:[%s8] sm:$0xff]
    %v1242 = vld [vmem:[%s8 + $0x8] sm:$0xff]
    %v1243 = vld [vmem:[%s8 + $0x10] sm:$0xff]
    %v1244 = vld [vmem:[%s8 + $0x18] sm:$0xff]
    %v1245 = vld [vmem:[%s8 + $0x20] sm:$0xff]
    %v1246 = vld [vmem:[%s8 + $0x28] sm:$0xff]
    %v1247 = vld [vmem:[%s8 + $0x30] sm:$0xff]
    %v1248 = vld [vmem:[%s8 + $0x38] sm:$0xff]
    %v1249 = vld [vmem:[%s9] sm:$0x1]
    %v1251 = vlaneseq
    %v1252 = vshrl.u32 %v1251, 7
    %v1253 = vsub.s32 0, %v1252
    %v1254 = vrot.slane %v1249, %v1253
    %v1257 = vsel %vm916, %v1237, 0
    %v1260 = vsel %vm916, %v1238, 0
    %v1263 = vsel %vm916, %v1239, 0
    %v1266 = vsel %vm916, %v1240, 0
    %1268 = vmatprep.subr.mxu0 0.0
    %1269 = vmatpush1.msra.mxu0 0.0
    %1270 = vmatprep.subr.mxu0 0.0
    %1271 = vmatpush1.msra.mxu0 0.0
    %1272 = vmatprep.subr.mxu0 0.0
    %1273 = vmatpush1.msra.mxu0 0.0
    %1274 = vmatprep.subr.mxu0 0.0
    %1275 = vmatpush1.msra.mxu0 0.0
    %1276 = vmatprep.subr.mxu0 0.0
    %1277 = vmatpush1.msra.mxu0 0.0
    %1278 = vmatprep.subr.mxu0 0.0
    %1279 = vmatpush1.msra.mxu0 0.0
    %1280 = vmatprep.subr.mxu0 0.0
    %1281 = vmatpush1.msra.mxu0 0.0
    %1282 = vmatprep.subr.mxu0 0.0
    %1283 = vmatpush1.msra.mxu0 0.0
    %1284 = vmatprep.subr.mxu0 0.0
    %1285 = vmatpush1.msra.mxu0 %v1248
    %1286 = vmatprep.subr.mxu0 0.0
    %1287 = vmatpush1.msra.mxu0 %v1247
    %1288 = vmatprep.subr.mxu0 0.0
    %1289 = vmatpush1.msra.mxu0 %v1246
    %1290 = vmatprep.subr.mxu0 0.0
    %1291 = vmatpush1.msra.mxu0 %v1245
    %1292 = vmatprep.subr.mxu0 0.0
    %1293 = vmatpush1.msra.mxu0 %v1244
    %1294 = vmatprep.subr.mxu0 0.0
    %1295 = vmatpush1.msra.mxu0 %v1243
    %1296 = vmatprep.subr.mxu0 0.0
    %1297 = vmatpush1.msra.mxu0 %v1242
    %1298 = vmatprep.subr.mxu0 0.0
    %1299 = vmatpush1.msra.mxu0 %v1241
    %1300 = vmatprep.subr.mxu0 0.0
    %1301 = vmatpush2.msra.mxu0 0.0
    %1302 = vmatprep.subr.mxu0 0.0
    %1303 = vmatpush2.msra.mxu0 0.0
    %1304 = vmatprep.subr.mxu0 0.0
    %1305 = vmatpush2.msra.mxu0 0.0
    %1306 = vmatprep.subr.mxu0 0.0
    %1307 = vmatpush2.msra.mxu0 0.0
    %1308 = vmatprep.subr.mxu0 0.0
    %1309 = vmatpush2.msra.mxu0 0.0
    %1310 = vmatprep.subr.mxu0 0.0
    %1311 = vmatpush2.msra.mxu0 0.0
    %1312 = vmatprep.subr.mxu0 0.0
    %1313 = vmatpush2.msra.mxu0 0.0
    %1314 = vmatprep.subr.mxu0 0.0
    %1315 = vmatpush2.msra.mxu0 0.0
    %1316 = vmatprep.subr.mxu0 0.0
    %1317 = vmatpush2.msra.mxu0 0.0
    %1318 = vmatprep.subr.mxu0 0.0
    %1319 = vmatpush2.msra.mxu0 0.0
    %1320 = vmatprep.subr.mxu0 0.0
    %1321 = vmatpush2.msra.mxu0 0.0
    %1322 = vmatprep.subr.mxu0 0.0
    %1323 = vmatpush2.msra.mxu0 0.0
    %1324 = vmatprep.subr.mxu0 0.0
    %1325 = vmatpush2.msra.mxu0 0.0
    %1326 = vmatprep.subr.mxu0 0.0
    %1327 = vmatpush2.msra.mxu0 0.0
    %1328 = vmatprep.subr.mxu0 0.0
    %1329 = vmatpush2.msra.mxu0 0.0
    %1330 = vmatprep.subr.mxu0 0.0
    %1331 = vmatpush2.msra.mxu0 0.0
    %1332 = vmatprep.mubr.f32.mxu0 0.0
    %1333 = vmatmul.mubr.f32.gmra.mxu0 %v1257
    %v1334 = vpop.f32.mrf.mxu0
    %v1335 = vadd.f32 %v1254, %v1334
    %v1336 = vpop.f32.mrf.mxu0
    %1337 = vmatprep.mubr.f32.mxu0 0.0
    %1338 = vmatmul.mubr.f32.gmra.mxu0 %v1260
    %v1339 = vpop.f32.mrf.mxu0
    %v1340 = vadd.f32 %v1254, %v1339
    %v1341 = vpop.f32.mrf.mxu0
    %1342 = vmatprep.mubr.f32.mxu0 0.0
    %1343 = vmatmul.mubr.f32.gmra.mxu0 %v1263
    %v1344 = vpop.f32.mrf.mxu0
    %v1345 = vadd.f32 %v1254, %v1344
    %v1346 = vpop.f32.mrf.mxu0
    %1347 = vmatprep.mubr.f32.mxu0 0.0
    %1348 = vmatmul.mubr.f32.gmra.mxu0 %v1266
    %v1349 = vpop.f32.mrf.mxu0
    %v1350 = vadd.f32 %v1254, %v1349
    %v1351 = vpop.f32.mrf.mxu0
    %1352 = vdwg.mxu0
    %v1353 = vsub.f32 0.0, %v1335
    %v1354 = vsub.f32 0.0, %v1340
    %v1355 = vsub.f32 0.0, %v1345
    %v1356 = vsub.f32 0.0, %v1350
    %v1357 = vmul.f32 %v1353, 1.442695
    %v1358 = vpow.pop %v1357
    %v1359 = vmul.f32 %v1354, 1.442695
    %v1360 = vpow.pop %v1359
    %v1361 = vmul.f32 %v1355, 1.442695
    %v1362 = vpow.pop %v1361
    %v1363 = vmul.f32 %v1356, 1.442695
    %v1364 = vpow.pop %v1363
    %v1365 = vadd.f32 %v1358, 1.0
    %v1366 = vadd.f32 %v1360, 1.0
    %v1367 = vadd.f32 %v1362, 1.0
    %v1368 = vadd.f32 %v1364, 1.0
    %v1369 = vrcp.pop %v1365
    %v1370 = vrcp.pop %v1366
    %v1371 = vrcp.pop %v1367
    %v1372 = vrcp.pop %v1368
    %s1373 = sld [smem:[#allocation2]]
    %s1374 = sld [smem:[#allocation2 + $0x1]]
    %s1375 = sld [smem:[#allocation2 + $0x2]]
    %v1376 = vstv %s1373
    %v1377 = vmul.f32 %v1369, %v1376
    %v1378 = vmul.f32 %v1370, %v1376
    %v1379 = vmul.f32 %v1371, %v1376
    %v1380 = vmul.f32 %v1372, %v1376
    %v1381 = vstv %s1374
    %v1382 = vmul.f32 %v1369, %v1381
    %v1383 = vmul.f32 %v1370, %v1381
    %v1384 = vmul.f32 %v1371, %v1381
    %v1385 = vmul.f32 %v1372, %v1381
    %1390 = vrot.lane.b32.xlu0 %v1382, 127
    %v1391 = vpop.permute.xlu0 %1390
    %1392 = vrot.lane.b32.xlu0 %v1383, 127
    %v1393 = vpop.permute.xlu0 %1392
    %1394 = vrot.lane.b32.xlu0 %v1384, 127
    %v1395 = vpop.permute.xlu0 %1394
    %1396 = vrot.lane.b32.xlu0 %v1385, 127
    %v1397 = vpop.permute.xlu0 %1396
    %v1402 = vadd.f32 %v1377, %v1391
    %v1403 = vadd.f32 %v1378, %v1393
    %v1404 = vadd.f32 %v1379, %v1395
    %v1405 = vadd.f32 %v1380, %v1397
    %v1406 = vstv %s1375
    %v1407 = vadd.f32 %v1402, %v1406
    %v1408 = vadd.f32 %v1403, %v1406
    %v1409 = vadd.f32 %v1404, %v1406
    %v1410 = vadd.f32 %v1405, %v1406
    %v1411 = vld [vmem:[%s4] sm:$0xff]
    %v1412 = vld [vmem:[%s4 + $0x8] sm:$0xff]
    %v1413 = vld [vmem:[%s4 + $0x10] sm:$0xff]
    %v1414 = vld [vmem:[%s4 + $0x18] sm:$0xff]
    %v1415 = vadd.f32 %v1407, 1e-05
    %v1416 = vadd.f32 %v1408, 1e-05
    %v1417 = vadd.f32 %v1409, 1e-05
    %v1418 = vadd.f32 %v1410, 1e-05
    %v1419 = vrcp.pop %v1415
    %v1420 = vmul.f32 %v1411, %v1419
    %v1421 = vrcp.pop %v1416
    %v1422 = vmul.f32 %v1412, %v1421
    %v1423 = vrcp.pop %v1417
    %v1424 = vmul.f32 %v1413, %v1423
    %v1425 = vrcp.pop %v1418
    %v1426 = vmul.f32 %v1414, %v1425
    %v1427 = vrcp.pop 10.0
    %v1428 = vmul.f32 %v1420, %v1427
    %v1429 = vmul.f32 %v1422, %v1427
    %v1430 = vmul.f32 %v1424, %v1427
    %v1431 = vmul.f32 %v1426, %v1427
    %v1432 = vround.ne.pseudo %v1428
    %v1433 = vround.ne.pseudo %v1429
    %v1434 = vround.ne.pseudo %v1430
    %v1435 = vround.ne.pseudo %v1431
    %vm1436 = vcmp.lt.f32.partialorder %v1432, 0.0
    %vm1437 = vcmp.lt.f32.partialorder %v1433, 0.0
    %vm1438 = vcmp.lt.f32.partialorder %v1434, 0.0
    %vm1439 = vcmp.lt.f32.partialorder %v1435, 0.0
    %v1440 = vsel %vm1436, 0.0, %v1432
    %v1441 = vsel %vm1437, 0.0, %v1433
    %v1442 = vsel %vm1438, 0.0, %v1434
    %v1443 = vsel %vm1439, 0.0, %v1435
    %vm1444 = vcmp.gt.f32.partialorder %v1440, 8.0
    %vm1445 = vcmp.gt.f32.partialorder %v1441, 8.0
    %vm1446 = vcmp.gt.f32.partialorder %v1442, 8.0
    %vm1447 = vcmp.gt.f32.partialorder %v1443, 8.0
    %v1448 = vsel %vm1444, 7.0, %v1440
    %v1449 = vsel %vm1445, 7.0, %v1441
    %v1450 = vsel %vm1446, 7.0, %v1442
    %v1451 = vsel %vm1447, 7.0, %v1443
    %v1452 = vsub.f32 8.0, %v1448
    %v1453 = vsub.f32 8.0, %v1449
    %v1454 = vsub.f32 8.0, %v1450
    %v1455 = vsub.f32 8.0, %v1451
    %v1456 = vmax.f32 %v1452, 1.0
    %v1457 = vmax.f32 %v1453, 1.0
    %v1458 = vmax.f32 %v1454, 1.0
    %v1459 = vmax.f32 %v1455, 1.0
    %1464 = vrot.lane.b32.xlu0 %v1420, 1
    %v1465 = vpop.permute.xlu0 %1464
    %1466 = vrot.lane.b32.xlu0 %v1422, 1
    %v1467 = vpop.permute.xlu0 %1466
    %1468 = vrot.lane.b32.xlu0 %v1424, 1
    %v1469 = vpop.permute.xlu0 %1468
    %1470 = vrot.lane.b32.xlu0 %v1426, 1
    %v1471 = vpop.permute.xlu0 %1470
    %v1476 = vmul.f32 %v1411, %v1465
    %v1477 = vmul.f32 %v1412, %v1467
    %v1478 = vmul.f32 %v1413, %v1469
    %v1479 = vmul.f32 %v1414, %v1471
    %v1480 = vadd.f32 %v1476, 1.0
    %v1481 = vadd.f32 %v1477, 1.0
    %v1482 = vadd.f32 %v1478, 1.0
    %v1483 = vadd.f32 %v1479, 1.0
    %v1484 = vrcp.pop %v1480
    %v1485 = vrcp.pop %v1481
    %v1486 = vrcp.pop %v1482
    %v1487 = vrcp.pop %v1483
    %v1488 = vsub.f32 1.0, %v1484
    %v1489 = vsub.f32 1.0, %v1485
    %v1490 = vsub.f32 1.0, %v1486
    %v1491 = vsub.f32 1.0, %v1487
    %v1492 = vcvt.s32.f32 %v55
    %v1493 = vsub.f32 %v1456, 1.0
    %v1494 = vsub.f32 %v1457, 1.0
    %v1495 = vsub.f32 %v1458, 1.0
    %v1496 = vsub.f32 %v1459, 1.0
    %1498 = vset.pattern.permute.xlu0 0
    %1499 = vperm.xlu0 %1498, %v1493
    %v1500 = vpop.permute.xlu0 %1499
    %1503 = vset.pattern.permute.xlu0 0
    %1504 = vperm.xlu0 %1503, %v1494
    %v1505 = vpop.permute.xlu0 %1504
    %1508 = vset.pattern.permute.xlu0 0
    %1509 = vperm.xlu0 %1508, %v1495
    %v1510 = vpop.permute.xlu0 %1509
    %1513 = vset.pattern.permute.xlu0 0
    %1514 = vperm.xlu0 %1513, %v1496
    %v1515 = vpop.permute.xlu0 %1514
    %v1517 = vsub.f32 %v1500, %v1492
    %v1518 = vsub.f32 %v1505, %v1492
    %v1519 = vsub.f32 %v1510, %v1492
    %v1520 = vsub.f32 %v1515, %v1492
    %v1521 = vmax.f32 %v1517, 0.0
    %v1522 = vmax.f32 %v1518, 0.0
    %v1523 = vmax.f32 %v1519, 0.0
    %v1524 = vmax.f32 %v1520, 0.0
    %v1525 = vcvt.f32.s32.to.zero.pseudo %v1521
    %v1526 = vcvt.f32.s32.to.zero.pseudo %v1522
    %v1527 = vcvt.f32.s32.to.zero.pseudo %v1523
    %v1528 = vcvt.f32.s32.to.zero.pseudo %v1524
    %v1529 = vand.u32 %v1525, 1
    %v1530 = vand.u32 %v1526, 1
    %v1531 = vand.u32 %v1527, 1
    %v1532 = vand.u32 %v1528, 1
    %vm1533 = vcmp.eq.s32.totalorder %v1529, 1
    %vm1534 = vcmp.eq.s32.totalorder %v1530, 1
    %vm1535 = vcmp.eq.s32.totalorder %v1531, 1
    %vm1536 = vcmp.eq.s32.totalorder %v1532, 1
    %1538 = vset.pattern.permute.xlu0 1
    %1539 = vperm.xlu0 %1538, %v1488
    %v1540 = vpop.permute.xlu0 %1539
    %1543 = vset.pattern.permute.xlu0 1
    %1544 = vperm.xlu0 %1543, %v1489
    %v1545 = vpop.permute.xlu0 %1544
    %1548 = vset.pattern.permute.xlu0 1
    %1549 = vperm.xlu0 %1548, %v1490
    %v1550 = vpop.permute.xlu0 %1549
    %1553 = vset.pattern.permute.xlu0 1
    %1554 = vperm.xlu0 %1553, %v1491
    %v1555 = vpop.permute.xlu0 %1554
    %v1557 = vsel %vm1533, %v1540, 1.0
    %v1558 = vsel %vm1534, %v1545, 1.0
    %v1559 = vsel %vm1535, %v1550, 1.0
    %v1560 = vsel %vm1536, %v1555, 1.0
    %v1561 = vmul.f32 %v1488, %v1488
    %v1562 = vmul.f32 %v1489, %v1489
    %v1563 = vmul.f32 %v1490, %v1490
    %v1564 = vmul.f32 %v1491, %v1491
    %v1565 = vshra.s32 %v1525, 1
    %v1566 = vshra.s32 %v1526, 1
    %v1567 = vshra.s32 %v1527, 1
    %v1568 = vshra.s32 %v1528, 1
    %v1569 = vand.u32 %v1565, 1
    %v1570 = vand.u32 %v1566, 1
    %v1571 = vand.u32 %v1567, 1
    %v1572 = vand.u32 %v1568, 1
    %vm1573 = vcmp.eq.s32.totalorder %v1569, 1
    %vm1574 = vcmp.eq.s32.totalorder %v1570, 1
    %vm1575 = vcmp.eq.s32.totalorder %v1571, 1
    %vm1576 = vcmp.eq.s32.totalorder %v1572, 1
    %1578 = vset.pattern.permute.xlu0 1
    %1579 = vperm.xlu0 %1578, %v1561
    %v1580 = vpop.permute.xlu0 %1579
    %1583 = vset.pattern.permute.xlu0 1
    %1584 = vperm.xlu0 %1583, %v1562
    %v1585 = vpop.permute.xlu0 %1584
    %1588 = vset.pattern.permute.xlu0 1
    %1589 = vperm.xlu0 %1588, %v1563
    %v1590 = vpop.permute.xlu0 %1589
    %1593 = vset.pattern.permute.xlu0 1
    %1594 = vperm.xlu0 %1593, %v1564
    %v1595 = vpop.permute.xlu0 %1594
    %v1597 = vmul.f32 %v1557, %v1580
    %v1598 = vmul.f32 %v1558, %v1585
    %v1599 = vmul.f32 %v1559, %v1590
    %v1600 = vmul.f32 %v1560, %v1595
    %v1601 = vsel %vm1573, %v1597, %v1557
    %v1602 = vsel %vm1574, %v1598, %v1558
    %v1603 = vsel %vm1575, %v1599, %v1559
    %v1604 = vsel %vm1576, %v1600, %v1560
    %v1605 = vmul.f32 %v1561, %v1561
    %v1606 = vmul.f32 %v1562, %v1562
    %v1607 = vmul.f32 %v1563, %v1563
    %v1608 = vmul.f32 %v1564, %v1564
    %v1609 = vshra.s32 %v1525, 2
    %v1610 = vshra.s32 %v1526, 2
    %v1611 = vshra.s32 %v1527, 2
    %v1612 = vshra.s32 %v1528, 2
    %v1613 = vand.u32 %v1609, 1
    %v1614 = vand.u32 %v1610, 1
    %v1615 = vand.u32 %v1611, 1
    %v1616 = vand.u32 %v1612, 1
    %vm1617 = vcmp.eq.s32.totalorder %v1613, 1
    %vm1618 = vcmp.eq.s32.totalorder %v1614, 1
    %vm1619 = vcmp.eq.s32.totalorder %v1615, 1
    %vm1620 = vcmp.eq.s32.totalorder %v1616, 1
    %1622 = vset.pattern.permute.xlu0 1
    %1623 = vperm.xlu0 %1622, %v1605
    %v1624 = vpop.permute.xlu0 %1623
    %1627 = vset.pattern.permute.xlu0 1
    %1628 = vperm.xlu0 %1627, %v1606
    %v1629 = vpop.permute.xlu0 %1628
    %1632 = vset.pattern.permute.xlu0 1
    %1633 = vperm.xlu0 %1632, %v1607
    %v1634 = vpop.permute.xlu0 %1633
    %1637 = vset.pattern.permute.xlu0 1
    %1638 = vperm.xlu0 %1637, %v1608
    %v1639 = vpop.permute.xlu0 %1638
    %v1641 = vmul.f32 %v1601, %v1624
    %v1642 = vmul.f32 %v1602, %v1629
    %v1643 = vmul.f32 %v1603, %v1634
    %v1644 = vmul.f32 %v1604, %v1639
    %v1645 = vsel %vm1617, %v1641, %v1601
    %v1646 = vsel %vm1618, %v1642, %v1602
    %v1647 = vsel %vm1619, %v1643, %v1603
    %v1648 = vsel %vm1620, %v1644, %v1604
    %1650 = vset.pattern.permute.xlu0 0
    %1651 = vperm.xlu0 %1650, %v1456
    %v1652 = vpop.permute.xlu0 %1651
    %1655 = vset.pattern.permute.xlu0 0
    %1656 = vperm.xlu0 %1655, %v1457
    %v1657 = vpop.permute.xlu0 %1656
    %1660 = vset.pattern.permute.xlu0 0
    %1661 = vperm.xlu0 %1660, %v1458
    %v1662 = vpop.permute.xlu0 %1661
    %1665 = vset.pattern.permute.xlu0 0
    %1666 = vperm.xlu0 %1665, %v1459
    %v1667 = vpop.permute.xlu0 %1666
    %vm1669 = vcmp.lt.f32.partialorder %v1492, %v1652
    %vm1670 = vcmp.lt.f32.partialorder %v1492, %v1657
    %vm1671 = vcmp.lt.f32.partialorder %v1492, %v1662
    %vm1672 = vcmp.lt.f32.partialorder %v1492, %v1667
    %1674 = vset.pattern.permute.xlu0 1
    %1675 = vperm.xlu0 %1674, %v1484
    %v1676 = vpop.permute.xlu0 %1675
    %1679 = vset.pattern.permute.xlu0 1
    %1680 = vperm.xlu0 %1679, %v1485
    %v1681 = vpop.permute.xlu0 %1680
    %1684 = vset.pattern.permute.xlu0 1
    %1685 = vperm.xlu0 %1684, %v1486
    %v1686 = vpop.permute.xlu0 %1685
    %1689 = vset.pattern.permute.xlu0 1
    %1690 = vperm.xlu0 %1689, %v1487
    %v1691 = vpop.permute.xlu0 %1690
    %v1693 = vmul.f32 %v1676, %v1645
    %v1694 = vmul.f32 %v1681, %v1646
    %v1695 = vmul.f32 %v1686, %v1647
    %v1696 = vmul.f32 %v1691, %v1648
    %v1697 = vsel %vm1669, %v1693, 0.0
    %v1698 = vsel %vm1670, %v1694, 0.0
    %v1699 = vsel %vm1671, %v1695, 0.0
    %v1700 = vsel %vm1672, %v1696, 0.0
    %v1701 = vsel %vm263, %v158, 0
    %1703 = vmatprep.subr.mxu0 0.0
    %1704 = vmatpush1.msra.mxu0 0.0
    %1705 = vmatprep.subr.mxu0 0.0
    %1706 = vmatpush1.msra.mxu0 0.0
    %1707 = vmatprep.subr.mxu0 0.0
    %1708 = vmatpush1.msra.mxu0 0.0
    %1709 = vmatprep.subr.mxu0 0.0
    %1710 = vmatpush1.msra.mxu0 0.0
    %1711 = vmatprep.subr.mxu0 0.0
    %1712 = vmatpush1.msra.mxu0 0.0
    %1713 = vmatprep.subr.mxu0 0.0
    %1714 = vmatpush1.msra.mxu0 0.0
    %1715 = vmatprep.subr.mxu0 0.0
    %1716 = vmatpush1.msra.mxu0 0.0
    %1717 = vmatprep.subr.mxu0 0.0
    %1718 = vmatpush1.msra.mxu0 0.0
    %1719 = vmatprep.subr.mxu0 0.0
    %1720 = vmatpush1.msra.mxu0 0.0
    %1721 = vmatprep.subr.mxu0 0.0
    %1722 = vmatpush1.msra.mxu0 0.0
    %1723 = vmatprep.subr.mxu0 0.0
    %1724 = vmatpush1.msra.mxu0 0.0
    %1725 = vmatprep.subr.mxu0 0.0
    %1726 = vmatpush1.msra.mxu0 0.0
    %1727 = vmatprep.subr.mxu0 0.0
    %1728 = vmatpush1.msra.mxu0 0.0
    %1729 = vmatprep.subr.mxu0 0.0
    %1730 = vmatpush1.msra.mxu0 %v1701
    %1731 = vmatprep.subr.mxu0 0.0
    %1732 = vmatpush1.msra.mxu0 %v157
    %1733 = vmatprep.subr.mxu0 0.0
    %1734 = vmatpush1.msra.mxu0 %v156
    %1735 = vmatprep.subr.mxu0 0.0
    %1736 = vmatpush2.msra.mxu0 0.0
    %1737 = vmatprep.subr.mxu0 0.0
    %1738 = vmatpush2.msra.mxu0 0.0
    %1739 = vmatprep.subr.mxu0 0.0
    %1740 = vmatpush2.msra.mxu0 0.0
    %1741 = vmatprep.subr.mxu0 0.0
    %1742 = vmatpush2.msra.mxu0 0.0
    %1743 = vmatprep.subr.mxu0 0.0
    %1744 = vmatpush2.msra.mxu0 0.0
    %1745 = vmatprep.subr.mxu0 0.0
    %1746 = vmatpush2.msra.mxu0 0.0
    %1747 = vmatprep.subr.mxu0 0.0
    %1748 = vmatpush2.msra.mxu0 0.0
    %1749 = vmatprep.subr.mxu0 0.0
    %1750 = vmatpush2.msra.mxu0 0.0
    %1751 = vmatprep.subr.mxu0 0.0
    %1752 = vmatpush2.msra.mxu0 0.0
    %1753 = vmatprep.subr.mxu0 0.0
    %1754 = vmatpush2.msra.mxu0 0.0
    %1755 = vmatprep.subr.mxu0 0.0
    %1756 = vmatpush2.msra.mxu0 0.0
    %1757 = vmatprep.subr.mxu0 0.0
    %1758 = vmatpush2.msra.mxu0 0.0
    %1759 = vmatprep.subr.mxu0 0.0
    %1760 = vmatpush2.msra.mxu0 0.0
    %1761 = vmatprep.subr.mxu0 0.0
    %1762 = vmatpush2.msra.mxu0 0.0
    %1763 = vmatprep.subr.mxu0 0.0
    %1764 = vmatpush2.msra.mxu0 0.0
    %1765 = vmatprep.subr.mxu0 0.0
    %1766 = vmatpush2.msra.mxu0 0.0
    %1767 = vmatprep.mubr.f32.mxu0 0.0
    %1768 = vmatmul.mubr.f32.gmra.mxu0 %v252
    %v1769 = vpop.f32.mrf.mxu0
    %v1770 = vadd.f32 0.0, %v1769
    %v1771 = vpop.f32.mrf.mxu0
    %1772 = vmatprep.mubr.f32.mxu0 0.0
    %1773 = vmatmul.mubr.f32.gmra.mxu0 %v255
    %v1774 = vpop.f32.mrf.mxu0
    %v1775 = vadd.f32 0.0, %v1774
    %v1776 = vpop.f32.mrf.mxu0
    %1777 = vmatprep.mubr.f32.mxu0 0.0
    %1778 = vmatmul.mubr.f32.gmra.mxu0 %v258
    %v1779 = vpop.f32.mrf.mxu0
    %v1780 = vadd.f32 0.0, %v1779
    %v1781 = vpop.f32.mrf.mxu0
    %1782 = vmatprep.mubr.f32.mxu0 0.0
    %1783 = vmatmul.mubr.f32.gmra.mxu0 %v261
    %v1784 = vpop.f32.mrf.mxu0
    %v1785 = vadd.f32 0.0, %v1784
    %v1786 = vpop.f32.mrf.mxu0
    %1787 = vdwg.mxu0
    %v1788 = vmul.f32 %v1697, %v1770
    %v1789 = vmul.f32 %v1698, %v1775
    %v1790 = vmul.f32 %v1699, %v1780
    %v1791 = vmul.f32 %v1700, %v1785
    %v1792 = vsel %vm160, %v1788, 0.0
    %1793 = vadd.xlane.f32.xlu0 %v1792
    %v1794 = vpop.xlane.xlu0 %1793
    %v1795 = vsel %vm160, %v1789, 0.0
    %1796 = vadd.xlane.f32.xlu0 %v1795
    %v1797 = vpop.xlane.xlu0 %1796
    %v1798 = vsel %vm160, %v1790, 0.0
    %1799 = vadd.xlane.f32.xlu0 %v1798
    %v1800 = vpop.xlane.xlu0 %1799
    %v1801 = vsel %vm160, %v1791, 0.0
    %1802 = vadd.xlane.f32.xlu0 %v1801
    %v1803 = vpop.xlane.xlu0 %1802
    %v1804 = vmul.f32 %v760, %v1794
    %v1805 = vmul.f32 %v761, %v1797
    %v1806 = vmul.f32 %v762, %v1800
    %v1807 = vmul.f32 %v763, %v1803
    %1809 = vset.pattern.permute.xlu0 0
    %1810 = vperm.xlu0 %1809, %v1804
    %v1811 = vpop.permute.xlu0 %1810
    %1814 = vset.pattern.permute.xlu0 0
    %1815 = vperm.xlu0 %1814, %v1805
    %v1816 = vpop.permute.xlu0 %1815
    %1819 = vset.pattern.permute.xlu0 0
    %1820 = vperm.xlu0 %1819, %v1806
    %v1821 = vpop.permute.xlu0 %1820
    %1824 = vset.pattern.permute.xlu0 0
    %1825 = vperm.xlu0 %1824, %v1807
    %v1826 = vpop.permute.xlu0 %1825
    %v1828 = vmul.f32 %v1811, %v152
    %v1829 = vmul.f32 %v1816, %v153
    %v1830 = vmul.f32 %v1821, %v154
    %v1831 = vmul.f32 %v1826, %v155
    %1832 = vxpose.xlu0.b32.start [1/16] %v112, 128
    %1833 = vxpose.xlu0.b32.cont [2/16] %v113, 128
    %1834 = vxpose.xlu0.b32.cont [3/16] %v114, 128
    %1835 = vxpose.xlu0.b32.cont [4/16] %v115, 128
    %1836 = vxpose.xlu0.b32.cont [5/16] 0.0, 128
    %1837 = vxpose.xlu0.b32.cont [6/16] 0.0, 128
    %1838 = vxpose.xlu0.b32.cont [7/16] 0.0, 128
    %1839 = vxpose.xlu0.b32.cont [8/16] 0.0, 128
    %1840 = vxpose.xlu0.b32.cont [9/16] 0.0, 128
    %1841 = vxpose.xlu0.b32.cont [10/16] 0.0, 128
    %1842 = vxpose.xlu0.b32.cont [11/16] 0.0, 128
    %1843 = vxpose.xlu0.b32.cont [12/16] 0.0, 128
    %1844 = vxpose.xlu0.b32.cont [13/16] 0.0, 128
    %1845 = vxpose.xlu0.b32.cont [14/16] 0.0, 128
    %1846 = vxpose.xlu0.b32.cont [15/16] 0.0, 128
    %1847 = vxpose.xlu0.b32.end [16/16] 0.0, 128
    %v1848 = vpop.trf.xlu0
    %v1849 = vpop.trf.xlu0
    %v1850 = vpop.trf.xlu0
    %v1851 = vpop.trf.xlu0
    %v1852 = vpop.trf.xlu0
    %v1853 = vpop.trf.xlu0
    %v1854 = vpop.trf.xlu0
    %v1855 = vpop.trf.xlu0
    %v1856 = vpop.trf.xlu0
    %v1857 = vpop.trf.xlu0
    %v1858 = vpop.trf.xlu0
    %v1859 = vpop.trf.xlu0
    %v1860 = vpop.trf.xlu0
    %v1861 = vpop.trf.xlu0
    %v1862 = vpop.trf.xlu0
    %v1863 = vpop.trf.xlu0
    %v1865 = vsel %vm578, %v1848, 0
    %1867 = vmatprep.subr.mxu0 0.0
    %1868 = vmatpush1.msra.mxu0 0.0
    %1869 = vmatprep.subr.mxu0 0.0
    %1870 = vmatpush1.msra.mxu0 0.0
    %1871 = vmatprep.subr.mxu0 0.0
    %1872 = vmatpush1.msra.mxu0 0.0
    %1873 = vmatprep.subr.mxu0 0.0
    %1874 = vmatpush1.msra.mxu0 0.0
    %1875 = vmatprep.subr.mxu0 0.0
    %1876 = vmatpush1.msra.mxu0 0.0
    %1877 = vmatprep.subr.mxu0 0.0
    %1878 = vmatpush1.msra.mxu0 0.0
    %1879 = vmatprep.subr.mxu0 0.0
    %1880 = vmatpush1.msra.mxu0 0.0
    %1881 = vmatprep.subr.mxu0 0.0
    %1882 = vmatpush1.msra.mxu0 0.0
    %1883 = vmatprep.subr.mxu0 0.0
    %1884 = vmatpush1.msra.mxu0 0.0
    %1885 = vmatprep.subr.mxu0 0.0
    %1886 = vmatpush1.msra.mxu0 0.0
    %1887 = vmatprep.subr.mxu0 0.0
    %1888 = vmatpush1.msra.mxu0 0.0
    %1889 = vmatprep.subr.mxu0 0.0
    %1890 = vmatpush1.msra.mxu0 0.0
    %1891 = vmatprep.subr.mxu0 0.0
    %1892 = vmatpush1.msra.mxu0 %v1831
    %1893 = vmatprep.subr.mxu0 0.0
    %1894 = vmatpush1.msra.mxu0 %v1830
    %1895 = vmatprep.subr.mxu0 0.0
    %1896 = vmatpush1.msra.mxu0 %v1829
    %1897 = vmatprep.subr.mxu0 0.0
    %1898 = vmatpush1.msra.mxu0 %v1828
    %1899 = vmatprep.subr.mxu0 0.0
    %1900 = vmatpush2.msra.mxu0 0.0
    %1901 = vmatprep.subr.mxu0 0.0
    %1902 = vmatpush2.msra.mxu0 0.0
    %1903 = vmatprep.subr.mxu0 0.0
    %1904 = vmatpush2.msra.mxu0 0.0
    %1905 = vmatprep.subr.mxu0 0.0
    %1906 = vmatpush2.msra.mxu0 0.0
    %1907 = vmatprep.subr.mxu0 0.0
    %1908 = vmatpush2.msra.mxu0 0.0
    %1909 = vmatprep.subr.mxu0 0.0
    %1910 = vmatpush2.msra.mxu0 0.0
    %1911 = vmatprep.subr.mxu0 0.0
    %1912 = vmatpush2.msra.mxu0 0.0
    %1913 = vmatprep.subr.mxu0 0.0
    %1914 = vmatpush2.msra.mxu0 0.0
    %1915 = vmatprep.subr.mxu0 0.0
    %1916 = vmatpush2.msra.mxu0 0.0
    %1917 = vmatprep.subr.mxu0 0.0
    %1918 = vmatpush2.msra.mxu0 0.0
    %1919 = vmatprep.subr.mxu0 0.0
    %1920 = vmatpush2.msra.mxu0 0.0
    %1921 = vmatprep.subr.mxu0 0.0
    %1922 = vmatpush2.msra.mxu0 0.0
    %1923 = vmatprep.subr.mxu0 0.0
    %1924 = vmatpush2.msra.mxu0 0.0
    %1925 = vmatprep.subr.mxu0 0.0
    %1926 = vmatpush2.msra.mxu0 0.0
    %1927 = vmatprep.subr.mxu0 0.0
    %1928 = vmatpush2.msra.mxu0 0.0
    %1929 = vmatprep.subr.mxu0 0.0
    %1930 = vmatpush2.msra.mxu0 0.0
    %1931 = vmatprep.mubr.f32.mxu0 0.0
    %1932 = vmatmul.mubr.f32.gmra.mxu0 %v1865
    %v1933 = vpop.f32.mrf.mxu0
    %v1934 = vadd.f32 0.0, %v1933
    %v1935 = vpop.f32.mrf.mxu0
    %1936 = vdwg.mxu0
    %vm1937 = vcmask 28672
    %1938 = vst.msk [vmem:[%s10] sm:$0x1f] %vm1937, %v1934
    %1940 = vset.pattern.permute.xlu0 0
    %1941 = vperm.xlu0 %1940, %v1407
    %v1942 = vpop.permute.xlu0 %1941
    %1945 = vset.pattern.permute.xlu0 0
    %1946 = vperm.xlu0 %1945, %v1408
    %v1947 = vpop.permute.xlu0 %1946
    %1950 = vset.pattern.permute.xlu0 0
    %1951 = vperm.xlu0 %1950, %v1409
    %v1952 = vpop.permute.xlu0 %1951
    %1955 = vset.pattern.permute.xlu0 0
    %1956 = vperm.xlu0 %1955, %v1410
    %v1957 = vpop.permute.xlu0 %1956
    %v1959 = vmul.f32 %v1942, %v152
    %v1960 = vmul.f32 %v1947, %v153
    %v1961 = vmul.f32 %v1952, %v154
    %v1962 = vmul.f32 %v1957, %v155
    %1963 = vxpose.xlu0.b32.start [1/16] %v132, 128
    %1964 = vxpose.xlu0.b32.cont [2/16] %v133, 128
    %1965 = vxpose.xlu0.b32.cont [3/16] %v134, 128
    %1966 = vxpose.xlu0.b32.cont [4/16] %v135, 128
    %1967 = vxpose.xlu0.b32.cont [5/16] 0.0, 128
    %1968 = vxpose.xlu0.b32.cont [6/16] 0.0, 128
    %1969 = vxpose.xlu0.b32.cont [7/16] 0.0, 128
    %1970 = vxpose.xlu0.b32.cont [8/16] 0.0, 128
    %1971 = vxpose.xlu0.b32.cont [9/16] 0.0, 128
    %1972 = vxpose.xlu0.b32.cont [10/16] 0.0, 128
    %1973 = vxpose.xlu0.b32.cont [11/16] 0.0, 128
    %1974 = vxpose.xlu0.b32.cont [12/16] 0.0, 128
    %1975 = vxpose.xlu0.b32.cont [13/16] 0.0, 128
    %1976 = vxpose.xlu0.b32.cont [14/16] 0.0, 128
    %1977 = vxpose.xlu0.b32.cont [15/16] 0.0, 128
    %1978 = vxpose.xlu0.b32.end [16/16] 0.0, 128
    %v1979 = vpop.trf.xlu0
    %v1980 = vpop.trf.xlu0
    %v1981 = vpop.trf.xlu0
    %v1982 = vpop.trf.xlu0
    %v1983 = vpop.trf.xlu0
    %v1984 = vpop.trf.xlu0
    %v1985 = vpop.trf.xlu0
    %v1986 = vpop.trf.xlu0
    %v1987 = vpop.trf.xlu0
    %v1988 = vpop.trf.xlu0
    %v1989 = vpop.trf.xlu0
    %v1990 = vpop.trf.xlu0
    %v1991 = vpop.trf.xlu0
    %v1992 = vpop.trf.xlu0
    %v1993 = vpop.trf.xlu0
    %v1994 = vpop.trf.xlu0
    %v1996 = vsel %vm578, %v1979, 0
    %1998 = vmatprep.subr.mxu0 0.0
    %1999 = vmatpush1.msra.mxu0 0.0
    %2000 = vmatprep.subr.mxu0 0.0
    %2001 = vmatpush1.msra.mxu0 0.0
    %2002 = vmatprep.subr.mxu0 0.0
    %2003 = vmatpush1.msra.mxu0 0.0
    %2004 = vmatprep.subr.mxu0 0.0
    %2005 = vmatpush1.msra.mxu0 0.0
    %2006 = vmatprep.subr.mxu0 0.0
    %2007 = vmatpush1.msra.mxu0 0.0
    %2008 = vmatprep.subr.mxu0 0.0
    %2009 = vmatpush1.msra.mxu0 0.0
    %2010 = vmatprep.subr.mxu0 0.0
    %2011 = vmatpush1.msra.mxu0 0.0
    %2012 = vmatprep.subr.mxu0 0.0
    %2013 = vmatpush1.msra.mxu0 0.0
    %2014 = vmatprep.subr.mxu0 0.0
    %2015 = vmatpush1.msra.mxu0 0.0
    %2016 = vmatprep.subr.mxu0 0.0
    %2017 = vmatpush1.msra.mxu0 0.0
    %2018 = vmatprep.subr.mxu0 0.0
    %2019 = vmatpush1.msra.mxu0 0.0
    %2020 = vmatprep.subr.mxu0 0.0
    %2021 = vmatpush1.msra.mxu0 0.0
    %2022 = vmatprep.subr.mxu0 0.0
    %2023 = vmatpush1.msra.mxu0 %v1962
    %2024 = vmatprep.subr.mxu0 0.0
    %2025 = vmatpush1.msra.mxu0 %v1961
    %2026 = vmatprep.subr.mxu0 0.0
    %2027 = vmatpush1.msra.mxu0 %v1960
    %2028 = vmatprep.subr.mxu0 0.0
    %2029 = vmatpush1.msra.mxu0 %v1959
    %2030 = vmatprep.subr.mxu0 0.0
    %2031 = vmatpush2.msra.mxu0 0.0
    %2032 = vmatprep.subr.mxu0 0.0
    %2033 = vmatpush2.msra.mxu0 0.0
    %2034 = vmatprep.subr.mxu0 0.0
    %2035 = vmatpush2.msra.mxu0 0.0
    %2036 = vmatprep.subr.mxu0 0.0
    %2037 = vmatpush2.msra.mxu0 0.0
    %2038 = vmatprep.subr.mxu0 0.0
    %2039 = vmatpush2.msra.mxu0 0.0
    %2040 = vmatprep.subr.mxu0 0.0
    %2041 = vmatpush2.msra.mxu0 0.0
    %2042 = vmatprep.subr.mxu0 0.0
    %2043 = vmatpush2.msra.mxu0 0.0
    %2044 = vmatprep.subr.mxu0 0.0
    %2045 = vmatpush2.msra.mxu0 0.0
    %2046 = vmatprep.subr.mxu0 0.0
    %2047 = vmatpush2.msra.mxu0 0.0
    %2048 = vmatprep.subr.mxu0 0.0
    %2049 = vmatpush2.msra.mxu0 0.0
    %2050 = vmatprep.subr.mxu0 0.0
    %2051 = vmatpush2.msra.mxu0 0.0
    %2052 = vmatprep.subr.mxu0 0.0
    %2053 = vmatpush2.msra.mxu0 0.0
    %2054 = vmatprep.subr.mxu0 0.0
    %2055 = vmatpush2.msra.mxu0 0.0
    %2056 = vmatprep.subr.mxu0 0.0
    %2057 = vmatpush2.msra.mxu0 0.0
    %2058 = vmatprep.subr.mxu0 0.0
    %2059 = vmatpush2.msra.mxu0 0.0
    %2060 = vmatprep.subr.mxu0 0.0
    %2061 = vmatpush2.msra.mxu0 0.0
    %2062 = vmatprep.mubr.f32.mxu0 0.0
    %2063 = vmatmul.mubr.f32.gmra.mxu0 %v1996
    %v2064 = vpop.f32.mrf.mxu0
    %v2065 = vadd.f32 0.0, %v2064
    %v2066 = vpop.f32.mrf.mxu0
    %2067 = vdwg.mxu0
    %vm2068 = vcmask 31744
    %2069 = vst.msk [vmem:[%s11] sm:$0xff] %vm2068, %v2065
    // Predicated region
    $region46: #{tpu_custom_call.1} parent=1 // pred_check
      _
    $region47: #{tpu_custom_call.1} parent=1 // pred_check_branch
      %2071 = sbr.rel (0) target = $region49
    $region48: #{tpu_custom_call.1} parent=1 // pred_region
      _
    $region49: #{tpu_custom_call.1} parent=1 // pred_fallthru
      _
    // Predicated region
    $region50: #{tpu_custom_call.1} parent=1 // pred_check
      _
    $region51: #{tpu_custom_call.1} parent=1 // pred_check_branch
      %2073 = sbr.rel (0) target = $region53
    $region52: #{tpu_custom_call.1} parent=1 // pred_region
      _
    $region53: #{tpu_custom_call.1} parent=1 // pred_fallthru
      _
    // Predicated region
    $region54: #{tpu_custom_call.1} parent=1 // pred_check
      _
    $region55: #{tpu_custom_call.1} parent=1 // pred_check_branch
      %2075 = sbr.rel (0) target = $region57
    $region56: #{tpu_custom_call.1} parent=1 // pred_region
      _
    $region57: #{tpu_custom_call.1} parent=1 // pred_fallthru
      _
    // Predicated region
    $region58: #{tpu_custom_call.1} parent=1 // pred_check
      _
    $region59: #{tpu_custom_call.1} parent=1 // pred_check_branch
      %2077 = sbr.rel (0) target = $region61
    $region60: #{tpu_custom_call.1} parent=1 // pred_region
      _
    $region61: #{tpu_custom_call.1} parent=1 // pred_fallthru
      _
    %2078 = vsyncpa [#allocation3], 1

</llo_original>
